<compile_context>
chip_gen: v5e
topology: v5e:2x2
jax: 0.10.0
libtpu: 0.0.40
codegen_flags: <defaults>
</compile_context>

<pallas_src>
import jax
import jax.numpy as jnp
from jax.experimental import pallas as pl
from jax.experimental.pallas import tpu as pltpu


# ----------------------------------------------------------------------------
# Kernel 1: W warp (one big 2D matmul) + H warp (per-depth-slab 2D matmuls)
# ----------------------------------------------------------------------------
def _warp_hw_kernel(x_ref, mh_ref, mwt_ref, o_ref):
    # x_ref : (1, TILE, H, W)  input dtype (cast to bf16 here, no XLA cast pass)
    # mh_ref: (1, H, H) bf16 ; mwt_ref: (1, W, W) bf16 (M_w^T)
    # o_ref : (1, TILE, H, W) bf16
    _, tile, h, w = x_ref.shape
    mh = mh_ref[0]         # (H, H)
    mwt = mwt_ref[0]       # (W, W)

    # W warp: flatten (TILE, H) into M -> one (TILE*H, W) @ (W, W) matmul with a
    # single held RHS (leading-dim merge only; layout-free for H % 8 == 0).
    x = x_ref[0].astype(jnp.bfloat16).reshape(tile * h, w)
    yw = jnp.dot(x, mwt, preferred_element_type=jnp.float32)
    yw = yw.astype(jnp.bfloat16).reshape(tile, h, w)

    # H warp: plain 2-D (H, H) @ (H, W) matmul per depth slab.  H is already the
    # sublane dim of each slab, so no broadcast_to, no transpose, no relayout.
    for i in range(tile):              # static unroll; TILE is small (<= 16)
        slab = jnp.dot(mh, yw[i], preferred_element_type=jnp.float32)
        o_ref[0, i] = slab.astype(jnp.bfloat16)


# ----------------------------------------------------------------------------
# Kernel 2: D warp (lane-dense, N = H*W) + per-channel intensity rescale
# ----------------------------------------------------------------------------
def _warp_d_rescale_kernel(y_ref, md_ref, o_ref):
    # y_ref : (1, 1, D, H*W) bf16 ; md_ref: (1, D, D) bf16 ; o_ref: input dtype
    md = md_ref[0]                     # (D, D)
    y = y_ref[0, 0]                    # (D, H*W)

    # D warp: single 2-D matmul, M=D, K=D, N=H*W (lane dense, unmasked stores).
    z = jnp.dot(md, y, preferred_element_type=jnp.float32)   # (D, H*W) f32

    # rescale_intensity: this block is exactly one (B, C) channel.
    z_min = jnp.min(z)
    z_max = jnp.max(z)
    rng = z_max - z_min
    # one exact scalar reciprocal per channel (zero-range guarded)
    inv = 1.0 / jnp.where(rng > 0, rng, 1.0)
    o_ref[0, 0] = ((z - z_min) * inv).astype(o_ref.dtype)


# ----------------------------------------------------------------------------
# Glue: per-sample 1D interpolation matrices (flip + scale + shift folded in)
# ----------------------------------------------------------------------------
def _interp_matrix_1d(n, scale, trans_frac, flip):
    """(n, n) linear-interp matrix: out[i] = sum_j M[i, j] * in[j]."""
    i = jnp.arange(n, dtype=jnp.float32)
    c = (n - 1) / 2.0
    src = (i - c) / scale + c - trans_frac * n
    src = jnp.where(flip, (n - 1.0) - src, src)
    s0 = jnp.floor(src)
    w1 = src - s0
    j = jnp.arange(n, dtype=jnp.float32)[None, :]
    s0c, w1c = s0[:, None], w1[:, None]
    in0 = (s0c >= 0) & (s0c <= n - 1)
    in1 = (s0c + 1 >= 0) & (s0c + 1 <= n - 1)
    m = (jnp.where((j == s0c) & in0, 1.0 - w1c, 0.0)
         + jnp.where((j == s0c + 1.0) & in1, w1c, 0.0))
    return m


def _build_sample_matrices(key, d, h, w,
                           p_affine=0.5, p_flip=0.5,
                           scale_range=(0.95, 1.05),
                           shift=(0.02, 0.02, 0.02)):
    ks = jax.random.split(key, 6)
    flip_v = jax.random.bernoulli(ks[0], p_flip)   # flips H (vertical)
    flip_h = jax.random.bernoulli(ks[1], p_flip)   # flips W (horizontal)
    flip_d = jax.random.bernoulli(ks[2], p_flip)   # flips D (depth)
    apply_aff = jax.random.bernoulli(ks[3], p_affine)
    s = jax.random.uniform(ks[4], (), minval=scale_range[0], maxval=scale_range[1])
    t = jax.random.uniform(ks[5], (3,), minval=-1.0, maxval=1.0) * jnp.asarray(shift)
    s = jnp.where(apply_aff, s, 1.0)
    t = jnp.where(apply_aff, t, jnp.zeros(3))

    m_d = _interp_matrix_1d(d, s, t[0], flip_d)
    m_h = _interp_matrix_1d(h, s, t[1], flip_v)
    m_w = _interp_matrix_1d(w, s, t[2], flip_h)
    return m_d, m_h, m_w.T          # M_w^T so the kernel can right-multiply


def _sample_matrices_batch(key, b, d, h, w):
    keys = jax.random.split(key, b)
    m_d, m_h, m_wt = jax.vmap(lambda kk: _build_sample_matrices(kk, d, h, w))(keys)
    return (m_d.astype(jnp.bfloat16),
            m_h.astype(jnp.bfloat16),
            m_wt.astype(jnp.bfloat16))


# ----------------------------------------------------------------------------
# Wrapper
# ----------------------------------------------------------------------------
def _pick_tile(n, target=16):
    """Largest divisor of n that is <= target (exact-division tiling)."""
    best = 1
    for t in range(1, min(n, target) + 1):
        if n % t == 0:
            best = t
    return best


def _compiler_params(step_bytes):
    # v7x has only 64 MiB physical VMEM -> keep the scoped limit <= ~48 MiB;
    # the per-step blocks chosen below are far smaller, so this is generous
    # headroom for double-buffering + f32 matmul temporaries on all parts.
    vmem = int(min(max(3 * step_bytes, 16 * 1024 * 1024), 48 * 1024 * 1024))
    return pltpu.CompilerParams(
        dimension_semantics=("parallel", "parallel"),
        vmem_limit_bytes=vmem,
    )


@jax.jit
def training_augments(x, key):
    assert x.ndim == 5
    b, c, d, h, w = x.shape
    out_dtype = x.dtype

    m_d, m_h, m_wt = _sample_matrices_batch(key, b, d, h, w)

    tile = _pick_tile(c * d, target=16)
    n_tiles = (c * d) // tile

    # free metadata view; the bf16 cast happens inside kernel 1 (no extra HBM pass)
    x4 = x.reshape(b, c * d, h, w)

    # ---- kernel 1: W and H warps, grid = (B, C*D / TILE) -------------------
    y_hw = pl.pallas_call(
        _warp_hw_kernel,
        out_shape=jax.ShapeDtypeStruct((b, c * d, h, w), jnp.bfloat16),
        grid_spec=pltpu.PrefetchScalarGridSpec(
            num_scalar_prefetch=0,
            grid=(b, n_tiles),
            in_specs=[
                pl.BlockSpec((1, tile, h, w), lambda bi, ti: (bi, ti, 0, 0)),
                # per-sample matrices: index_map ignores the tile axis -> resident
                pl.BlockSpec((1, h, h), lambda bi, ti: (bi, 0, 0)),
                pl.BlockSpec((1, w, w), lambda bi, ti: (bi, 0, 0)),
            ],
            out_specs=pl.BlockSpec((1, tile, h, w), lambda bi, ti: (bi, ti, 0, 0)),
        ),
        compiler_params=_compiler_params(tile * h * w * (4 + 2)),
    )(x4, m_h, m_wt)

    # (B, C*D, H, W) -> (B, C, D, H*W): pure row-major metadata change (free at
    # the HBM boundary); gives kernel 2 a lane-dense N = H*W matmul and blocks
    # that each hold exactly one (B, C) channel for the rescale.
    y_hw = y_hw.reshape(b, c, d, h * w)

    # ---- kernel 2: D warp + per-channel intensity rescale, grid = (B, C) ---
    out2d = pl.pallas_call(
        _warp_d_rescale_kernel,
        out_shape=jax.ShapeDtypeStruct((b, c, d, h * w), out_dtype),
        grid_spec=pltpu.PrefetchScalarGridSpec(
            num_scalar_prefetch=0,
            grid=(b, c),
            in_specs=[
                pl.BlockSpec((1, 1, d, h * w), lambda bi, ci: (bi, ci, 0, 0)),
                pl.BlockSpec((1, d, d), lambda bi, ci: (bi, 0, 0)),
            ],
            out_specs=pl.BlockSpec((1, 1, d, h * w), lambda bi, ci: (bi, ci, 0, 0)),
        ),
        compiler_params=_compiler_params(d * h * w * (2 + 4 + 4)),
    )(y_hw, m_d)

    return out2d.reshape(b, c, d, h, w)


# ----------------------------------------------------------------------------
# Pure-JAX reference (mirrors the kernel math, incl. bf16 casts) for checking
# ----------------------------------------------------------------------------
def _reference(x, key):
    b, c, d, h, w = x.shape
    m_d, m_h, m_wt = _sample_matrices_batch(key, b, d, h, w)
    xb = x.astype(jnp.bfloat16)
    # W warp
    y = jnp.einsum('bcdhw,bwv->bcdhv', xb, m_wt,
                   preferred_element_type=jnp.float32).astype(jnp.bfloat16)
    # H warp
    y = jnp.einsum('bhe,bcdew->bcdhw', m_h, y,
                   preferred_element_type=jnp.float32).astype(jnp.bfloat16)
    # D warp
    y = jnp.einsum('bdk,bckhw->bcdhw', m_d, y,
                   preferred_element_type=jnp.float32)
    y_min = y.min(axis=(2, 3, 4), keepdims=True)
    y_max = y.max(axis=(2, 3, 4), keepdims=True)
    rng = y_max - y_min
    inv = 1.0 / jnp.where(rng > 0, rng, 1.0)
    return ((y - y_min) * inv).astype(x.dtype)


if __name__ == "__main__":
    key = jax.random.PRNGKey(0)
    k_data, k_aug = jax.random.split(key)

    # small 5D volume: (B, C, D, H, W)
    x = jax.random.normal(k_data, (2, 4, 8, 16, 16), dtype=jnp.float32)

    out = training_augments(x, k_aug)
    out = jax.block_until_ready(out)

    ref = _reference(x, k_aug)
    assert out.shape == x.shape
    assert out.dtype == x.dtype
    assert bool(jnp.all(jnp.isfinite(out)))
    # intensity rescale => per-(B,C) min == 0 and max == 1
    assert bool(jnp.allclose(out.min(axis=(2, 3, 4)), 0.0, atol=1e-5))
    assert bool(jnp.allclose(out.max(axis=(2, 3, 4)), 1.0, atol=1e-5))
    assert bool(jnp.allclose(out, ref, atol=1e-4, rtol=1e-4))

    print("KERNEL_OK")
</pallas_src>

<mosaic_0001>
module attributes {stable_mosaic.version = 11 : i64} {
  func.func @_warp_hw_kernel(%arg0: i32, %arg1: i32, %arg2: memref<1x16x16x16xf32, #tpu.memory_space<vmem>>, %arg3: memref<1x16x16xbf16, #tpu.memory_space<vmem>>, %arg4: memref<1x16x16xbf16, #tpu.memory_space<vmem>>, %arg5: memref<1x16x16x16xbf16, #tpu.memory_space<vmem>>) attributes {dimension_semantics = [#tpu.dimension_semantics<parallel>, #tpu.dimension_semantics<parallel>], iteration_bounds = array<i64: 2, 2>, scalar_prefetch = 0 : i64, scratch_operands = 0 : i64, tpu.core_type = #tpu.core_type<tc>, window_params = [{transform_indices = @transform_0, window_bounds = array<i64: 1, 16, 16, 16>}, {transform_indices = @transform_1, window_bounds = array<i64: 1, 16, 16>}, {transform_indices = @transform_2, window_bounds = array<i64: 1, 16, 16>}, {transform_indices = @transform_3, window_bounds = array<i64: 1, 16, 16, 16>}]} {
    %c0 = arith.constant 0 : index
    %c0_0 = arith.constant 0 : index
    %c0_1 = arith.constant 0 : index
    %0 = vector.load %arg3[%c0, %c0_0, %c0_1] : memref<1x16x16xbf16, #tpu.memory_space<vmem>>, vector<1x16x16xbf16>
    %1 = vector.shape_cast %0 : vector<1x16x16xbf16> to vector<16x16xbf16>
    %c0_2 = arith.constant 0 : index
    %c0_3 = arith.constant 0 : index
    %c0_4 = arith.constant 0 : index
    %2 = vector.load %arg4[%c0_2, %c0_3, %c0_4] : memref<1x16x16xbf16, #tpu.memory_space<vmem>>, vector<1x16x16xbf16>
    %3 = vector.shape_cast %2 : vector<1x16x16xbf16> to vector<16x16xbf16>
    %c0_5 = arith.constant 0 : index
    %c0_6 = arith.constant 0 : index
    %c0_7 = arith.constant 0 : index
    %c0_8 = arith.constant 0 : index
    %4 = vector.load %arg2[%c0_5, %c0_6, %c0_7, %c0_8] : memref<1x16x16x16xf32, #tpu.memory_space<vmem>>, vector<1x16x16x16xf32>
    %5 = vector.shape_cast %4 : vector<1x16x16x16xf32> to vector<16x16x16xf32>
    %6 = arith.truncf %5 : vector<16x16x16xf32> to vector<16x16x16xbf16>
    %7 = vector.shape_cast %6 : vector<16x16x16xbf16> to vector<256x16xbf16>
    %cst = arith.constant dense<0.000000e+00> : vector<256x16xf32>
    %8 = tpu.matmul %7, %3, %cst {dimension_numbers = #tpu.dot_dimension_numbers<[1], [0], [0], [1], [0, 0, 1, 1], [], []>} : vector<256x16xbf16>, vector<16x16xbf16>, vector<256x16xf32> -> vector<256x16xf32>
    %9 = arith.truncf %8 : vector<256x16xf32> to vector<256x16xbf16>
    %10 = vector.shape_cast %9 : vector<256x16xbf16> to vector<16x16x16xbf16>
    %11 = vector.extract_strided_slice %10 {offsets = [0, 0, 0], sizes = [1, 16, 16], strides = [1, 1, 1]} : vector<16x16x16xbf16> to vector<1x16x16xbf16>
    %12 = vector.shape_cast %11 : vector<1x16x16xbf16> to vector<16x16xbf16>
    %cst_9 = arith.constant dense<0.000000e+00> : vector<16x16xf32>
    %13 = tpu.matmul %1, %12, %cst_9 {dimension_numbers = #tpu.dot_dimension_numbers<[1], [0], [0], [1], [0, 0, 1, 1], [], []>} : vector<16x16xbf16>, vector<16x16xbf16>, vector<16x16xf32> -> vector<16x16xf32>
    %14 = arith.truncf %13 : vector<16x16xf32> to vector<16x16xbf16>
    %c0_10 = arith.constant 0 : index
    %c0_11 = arith.constant 0 : index
    %c0_12 = arith.constant 0 : index
    %c0_13 = arith.constant 0 : index
    %15 = vector.load %arg5[%c0_10, %c0_11, %c0_12, %c0_13] : memref<1x16x16x16xbf16, #tpu.memory_space<vmem>>, vector<1x1x16x16xbf16>
    %16 = vector.shape_cast %15 : vector<1x1x16x16xbf16> to vector<16x16xbf16>
    %17 = vector.shape_cast %14 : vector<16x16xbf16> to vector<1x1x16x16xbf16>
    tpu.vector_store %arg5[%c0_10, %c0_11, %c0_12, %c0_13], %17 {strides = array<i32>} : memref<1x16x16x16xbf16, #tpu.memory_space<vmem>>, vector<1x1x16x16xbf16>,
    %18 = vector.extract_strided_slice %10 {offsets = [1, 0, 0], sizes = [1, 16, 16], strides = [1, 1, 1]} : vector<16x16x16xbf16> to vector<1x16x16xbf16>
    %19 = vector.shape_cast %18 : vector<1x16x16xbf16> to vector<16x16xbf16>
    %cst_14 = arith.constant dense<0.000000e+00> : vector<16x16xf32>
    %20 = tpu.matmul %1, %19, %cst_14 {dimension_numbers = #tpu.dot_dimension_numbers<[1], [0], [0], [1], [0, 0, 1, 1], [], []>} : vector<16x16xbf16>, vector<16x16xbf16>, vector<16x16xf32> -> vector<16x16xf32>
    %21 = arith.truncf %20 : vector<16x16xf32> to vector<16x16xbf16>
    %c0_15 = arith.constant 0 : index
    %c1 = arith.constant 1 : index
    %c0_16 = arith.constant 0 : index
    %c0_17 = arith.constant 0 : index
    %22 = vector.load %arg5[%c0_15, %c1, %c0_16, %c0_17] : memref<1x16x16x16xbf16, #tpu.memory_space<vmem>>, vector<1x1x16x16xbf16>
    %23 = vector.shape_cast %22 : vector<1x1x16x16xbf16> to vector<16x16xbf16>
    %24 = vector.shape_cast %21 : vector<16x16xbf16> to vector<1x1x16x16xbf16>
    tpu.vector_store %arg5[%c0_15, %c1, %c0_16, %c0_17], %24 {strides = array<i32>} : memref<1x16x16x16xbf16, #tpu.memory_space<vmem>>, vector<1x1x16x16xbf16>,
    %25 = vector.extract_strided_slice %10 {offsets = [2, 0, 0], sizes = [1, 16, 16], strides = [1, 1, 1]} : vector<16x16x16xbf16> to vector<1x16x16xbf16>
    %26 = vector.shape_cast %25 : vector<1x16x16xbf16> to vector<16x16xbf16>
    %cst_18 = arith.constant dense<0.000000e+00> : vector<16x16xf32>
    %27 = tpu.matmul %1, %26, %cst_18 {dimension_numbers = #tpu.dot_dimension_numbers<[1], [0], [0], [1], [0, 0, 1, 1], [], []>} : vector<16x16xbf16>, vector<16x16xbf16>, vector<16x16xf32> -> vector<16x16xf32>
    %28 = arith.truncf %27 : vector<16x16xf32> to vector<16x16xbf16>
    %c0_19 = arith.constant 0 : index
    %c2 = arith.constant 2 : index
    %c0_20 = arith.constant 0 : index
    %c0_21 = arith.constant 0 : index
    %29 = vector.load %arg5[%c0_19, %c2, %c0_20, %c0_21] : memref<1x16x16x16xbf16, #tpu.memory_space<vmem>>, vector<1x1x16x16xbf16>
    %30 = vector.shape_cast %29 : vector<1x1x16x16xbf16> to vector<16x16xbf16>
    %31 = vector.shape_cast %28 : vector<16x16xbf16> to vector<1x1x16x16xbf16>
    tpu.vector_store %arg5[%c0_19, %c2, %c0_20, %c0_21], %31 {strides = array<i32>} : memref<1x16x16x16xbf16, #tpu.memory_space<vmem>>, vector<1x1x16x16xbf16>,
    %32 = vector.extract_strided_slice %10 {offsets = [3, 0, 0], sizes = [1, 16, 16], strides = [1, 1, 1]} : vector<16x16x16xbf16> to vector<1x16x16xbf16>
    %33 = vector.shape_cast %32 : vector<1x16x16xbf16> to vector<16x16xbf16>
    %cst_22 = arith.constant dense<0.000000e+00> : vector<16x16xf32>
    %34 = tpu.matmul %1, %33, %cst_22 {dimension_numbers = #tpu.dot_dimension_numbers<[1], [0], [0], [1], [0, 0, 1, 1], [], []>} : vector<16x16xbf16>, vector<16x16xbf16>, vector<16x16xf32> -> vector<16x16xf32>
    %35 = arith.truncf %34 : vector<16x16xf32> to vector<16x16xbf16>
    %c0_23 = arith.constant 0 : index
    %c3 = arith.constant 3 : index
    %c0_24 = arith.constant 0 : index
    %c0_25 = arith.constant 0 : index
    %36 = vector.load %arg5[%c0_23, %c3, %c0_24, %c0_25] : memref<1x16x16x16xbf16, #tpu.memory_space<vmem>>, vector<1x1x16x16xbf16>
    %37 = vector.shape_cast %36 : vector<1x1x16x16xbf16> to vector<16x16xbf16>
    %38 = vector.shape_cast %35 : vector<16x16xbf16> to vector<1x1x16x16xbf16>
    tpu.vector_store %arg5[%c0_23, %c3, %c0_24, %c0_25], %38 {strides = array<i32>} : memref<1x16x16x16xbf16, #tpu.memory_space<vmem>>, vector<1x1x16x16xbf16>,
    %39 = vector.extract_strided_slice %10 {offsets = [4, 0, 0], sizes = [1, 16, 16], strides = [1, 1, 1]} : vector<16x16x16xbf16> to vector<1x16x16xbf16>
    %40 = vector.shape_cast %39 : vector<1x16x16xbf16> to vector<16x16xbf16>
    %cst_26 = arith.constant dense<0.000000e+00> : vector<16x16xf32>
    %41 = tpu.matmul %1, %40, %cst_26 {dimension_numbers = #tpu.dot_dimension_numbers<[1], [0], [0], [1], [0, 0, 1, 1], [], []>} : vector<16x16xbf16>, vector<16x16xbf16>, vector<16x16xf32> -> vector<16x16xf32>
    %42 = arith.truncf %41 : vector<16x16xf32> to vector<16x16xbf16>
    %c0_27 = arith.constant 0 : index
    %c4 = arith.constant 4 : index
    %c0_28 = arith.constant 0 : index
    %c0_29 = arith.constant 0 : index
    %43 = vector.load %arg5[%c0_27, %c4, %c0_28, %c0_29] : memref<1x16x16x16xbf16, #tpu.memory_space<vmem>>, vector<1x1x16x16xbf16>
    %44 = vector.shape_cast %43 : vector<1x1x16x16xbf16> to vector<16x16xbf16>
    %45 = vector.shape_cast %42 : vector<16x16xbf16> to vector<1x1x16x16xbf16>
    tpu.vector_store %arg5[%c0_27, %c4, %c0_28, %c0_29], %45 {strides = array<i32>} : memref<1x16x16x16xbf16, #tpu.memory_space<vmem>>, vector<1x1x16x16xbf16>,
    %46 = vector.extract_strided_slice %10 {offsets = [5, 0, 0], sizes = [1, 16, 16], strides = [1, 1, 1]} : vector<16x16x16xbf16> to vector<1x16x16xbf16>
    %47 = vector.shape_cast %46 : vector<1x16x16xbf16> to vector<16x16xbf16>
    %cst_30 = arith.constant dense<0.000000e+00> : vector<16x16xf32>
    %48 = tpu.matmul %1, %47, %cst_30 {dimension_numbers = #tpu.dot_dimension_numbers<[1], [0], [0], [1], [0, 0, 1, 1], [], []>} : vector<16x16xbf16>, vector<16x16xbf16>, vector<16x16xf32> -> vector<16x16xf32>
    %49 = arith.truncf %48 : vector<16x16xf32> to vector<16x16xbf16>
    %c0_31 = arith.constant 0 : index
    %c5 = arith.constant 5 : index
    %c0_32 = arith.constant 0 : index
    %c0_33 = arith.constant 0 : index
    %50 = vector.load %arg5[%c0_31, %c5, %c0_32, %c0_33] : memref<1x16x16x16xbf16, #tpu.memory_space<vmem>>, vector<1x1x16x16xbf16>
    %51 = vector.shape_cast %50 : vector<1x1x16x16xbf16> to vector<16x16xbf16>
    %52 = vector.shape_cast %49 : vector<16x16xbf16> to vector<1x1x16x16xbf16>
    tpu.vector_store %arg5[%c0_31, %c5, %c0_32, %c0_33], %52 {strides = array<i32>} : memref<1x16x16x16xbf16, #tpu.memory_space<vmem>>, vector<1x1x16x16xbf16>,
    %53 = vector.extract_strided_slice %10 {offsets = [6, 0, 0], sizes = [1, 16, 16], strides = [1, 1, 1]} : vector<16x16x16xbf16> to vector<1x16x16xbf16>
    %54 = vector.shape_cast %53 : vector<1x16x16xbf16> to vector<16x16xbf16>
    %cst_34 = arith.constant dense<0.000000e+00> : vector<16x16xf32>
    %55 = tpu.matmul %1, %54, %cst_34 {dimension_numbers = #tpu.dot_dimension_numbers<[1], [0], [0], [1], [0, 0, 1, 1], [], []>} : vector<16x16xbf16>, vector<16x16xbf16>, vector<16x16xf32> -> vector<16x16xf32>
    %56 = arith.truncf %55 : vector<16x16xf32> to vector<16x16xbf16>
    %c0_35 = arith.constant 0 : index
    %c6 = arith.constant 6 : index
    %c0_36 = arith.constant 0 : index
    %c0_37 = arith.constant 0 : index
    %57 = vector.load %arg5[%c0_35, %c6, %c0_36, %c0_37] : memref<1x16x16x16xbf16, #tpu.memory_space<vmem>>, vector<1x1x16x16xbf16>
    %58 = vector.shape_cast %57 : vector<1x1x16x16xbf16> to vector<16x16xbf16>
    %59 = vector.shape_cast %56 : vector<16x16xbf16> to vector<1x1x16x16xbf16>
    tpu.vector_store %arg5[%c0_35, %c6, %c0_36, %c0_37], %59 {strides = array<i32>} : memref<1x16x16x16xbf16, #tpu.memory_space<vmem>>, vector<1x1x16x16xbf16>,
    %60 = vector.extract_strided_slice %10 {offsets = [7, 0, 0], sizes = [1, 16, 16], strides = [1, 1, 1]} : vector<16x16x16xbf16> to vector<1x16x16xbf16>
    %61 = vector.shape_cast %60 : vector<1x16x16xbf16> to vector<16x16xbf16>
    %cst_38 = arith.constant dense<0.000000e+00> : vector<16x16xf32>
    %62 = tpu.matmul %1, %61, %cst_38 {dimension_numbers = #tpu.dot_dimension_numbers<[1], [0], [0], [1], [0, 0, 1, 1], [], []>} : vector<16x16xbf16>, vector<16x16xbf16>, vector<16x16xf32> -> vector<16x16xf32>
    %63 = arith.truncf %62 : vector<16x16xf32> to vector<16x16xbf16>
    %c0_39 = arith.constant 0 : index
    %c7 = arith.constant 7 : index
    %c0_40 = arith.constant 0 : index
    %c0_41 = arith.constant 0 : index
    %64 = vector.load %arg5[%c0_39, %c7, %c0_40, %c0_41] : memref<1x16x16x16xbf16, #tpu.memory_space<vmem>>, vector<1x1x16x16xbf16>
    %65 = vector.shape_cast %64 : vector<1x1x16x16xbf16> to vector<16x16xbf16>
    %66 = vector.shape_cast %63 : vector<16x16xbf16> to vector<1x1x16x16xbf16>
    tpu.vector_store %arg5[%c0_39, %c7, %c0_40, %c0_41], %66 {strides = array<i32>} : memref<1x16x16x16xbf16, #tpu.memory_space<vmem>>, vector<1x1x16x16xbf16>,
    %67 = vector.extract_strided_slice %10 {offsets = [8, 0, 0], sizes = [1, 16, 16], strides = [1, 1, 1]} : vector<16x16x16xbf16> to vector<1x16x16xbf16>
    %68 = vector.shape_cast %67 : vector<1x16x16xbf16> to vector<16x16xbf16>
    %cst_42 = arith.constant dense<0.000000e+00> : vector<16x16xf32>
    %69 = tpu.matmul %1, %68, %cst_42 {dimension_numbers = #tpu.dot_dimension_numbers<[1], [0], [0], [1], [0, 0, 1, 1], [], []>} : vector<16x16xbf16>, vector<16x16xbf16>, vector<16x16xf32> -> vector<16x16xf32>
    %70 = arith.truncf %69 : vector<16x16xf32> to vector<16x16xbf16>
    %c0_43 = arith.constant 0 : index
    %c8 = arith.constant 8 : index
    %c0_44 = arith.constant 0 : index
    %c0_45 = arith.constant 0 : index
    %71 = vector.load %arg5[%c0_43, %c8, %c0_44, %c0_45] : memref<1x16x16x16xbf16, #tpu.memory_space<vmem>>, vector<1x1x16x16xbf16>
    %72 = vector.shape_cast %71 : vector<1x1x16x16xbf16> to vector<16x16xbf16>
    %73 = vector.shape_cast %70 : vector<16x16xbf16> to vector<1x1x16x16xbf16>
    tpu.vector_store %arg5[%c0_43, %c8, %c0_44, %c0_45], %73 {strides = array<i32>} : memref<1x16x16x16xbf16, #tpu.memory_space<vmem>>, vector<1x1x16x16xbf16>,
    %74 = vector.extract_strided_slice %10 {offsets = [9, 0, 0], sizes = [1, 16, 16], strides = [1, 1, 1]} : vector<16x16x16xbf16> to vector<1x16x16xbf16>
    %75 = vector.shape_cast %74 : vector<1x16x16xbf16> to vector<16x16xbf16>
    %cst_46 = arith.constant dense<0.000000e+00> : vector<16x16xf32>
    %76 = tpu.matmul %1, %75, %cst_46 {dimension_numbers = #tpu.dot_dimension_numbers<[1], [0], [0], [1], [0, 0, 1, 1], [], []>} : vector<16x16xbf16>, vector<16x16xbf16>, vector<16x16xf32> -> vector<16x16xf32>
    %77 = arith.truncf %76 : vector<16x16xf32> to vector<16x16xbf16>
    %c0_47 = arith.constant 0 : index
    %c9 = arith.constant 9 : index
    %c0_48 = arith.constant 0 : index
    %c0_49 = arith.constant 0 : index
    %78 = vector.load %arg5[%c0_47, %c9, %c0_48, %c0_49] : memref<1x16x16x16xbf16, #tpu.memory_space<vmem>>, vector<1x1x16x16xbf16>
    %79 = vector.shape_cast %78 : vector<1x1x16x16xbf16> to vector<16x16xbf16>
    %80 = vector.shape_cast %77 : vector<16x16xbf16> to vector<1x1x16x16xbf16>
    tpu.vector_store %arg5[%c0_47, %c9, %c0_48, %c0_49], %80 {strides = array<i32>} : memref<1x16x16x16xbf16, #tpu.memory_space<vmem>>, vector<1x1x16x16xbf16>,
    %81 = vector.extract_strided_slice %10 {offsets = [10, 0, 0], sizes = [1, 16, 16], strides = [1, 1, 1]} : vector<16x16x16xbf16> to vector<1x16x16xbf16>
    %82 = vector.shape_cast %81 : vector<1x16x16xbf16> to vector<16x16xbf16>
    %cst_50 = arith.constant dense<0.000000e+00> : vector<16x16xf32>
    %83 = tpu.matmul %1, %82, %cst_50 {dimension_numbers = #tpu.dot_dimension_numbers<[1], [0], [0], [1], [0, 0, 1, 1], [], []>} : vector<16x16xbf16>, vector<16x16xbf16>, vector<16x16xf32> -> vector<16x16xf32>
    %84 = arith.truncf %83 : vector<16x16xf32> to vector<16x16xbf16>
    %c0_51 = arith.constant 0 : index
    %c10 = arith.constant 10 : index
    %c0_52 = arith.constant 0 : index
    %c0_53 = arith.constant 0 : index
    %85 = vector.load %arg5[%c0_51, %c10, %c0_52, %c0_53] : memref<1x16x16x16xbf16, #tpu.memory_space<vmem>>, vector<1x1x16x16xbf16>
    %86 = vector.shape_cast %85 : vector<1x1x16x16xbf16> to vector<16x16xbf16>
    %87 = vector.shape_cast %84 : vector<16x16xbf16> to vector<1x1x16x16xbf16>
    tpu.vector_store %arg5[%c0_51, %c10, %c0_52, %c0_53], %87 {strides = array<i32>} : memref<1x16x16x16xbf16, #tpu.memory_space<vmem>>, vector<1x1x16x16xbf16>,
    %88 = vector.extract_strided_slice %10 {offsets = [11, 0, 0], sizes = [1, 16, 16], strides = [1, 1, 1]} : vector<16x16x16xbf16> to vector<1x16x16xbf16>
    %89 = vector.shape_cast %88 : vector<1x16x16xbf16> to vector<16x16xbf16>
    %cst_54 = arith.constant dense<0.000000e+00> : vector<16x16xf32>
    %90 = tpu.matmul %1, %89, %cst_54 {dimension_numbers = #tpu.dot_dimension_numbers<[1], [0], [0], [1], [0, 0, 1, 1], [], []>} : vector<16x16xbf16>, vector<16x16xbf16>, vector<16x16xf32> -> vector<16x16xf32>
    %91 = arith.truncf %90 : vector<16x16xf32> to vector<16x16xbf16>
    %c0_55 = arith.constant 0 : index
    %c11 = arith.constant 11 : index
    %c0_56 = arith.constant 0 : index
    %c0_57 = arith.constant 0 : index
    %92 = vector.load %arg5[%c0_55, %c11, %c0_56, %c0_57] : memref<1x16x16x16xbf16, #tpu.memory_space<vmem>>, vector<1x1x16x16xbf16>
    %93 = vector.shape_cast %92 : vector<1x1x16x16xbf16> to vector<16x16xbf16>
    %94 = vector.shape_cast %91 : vector<16x16xbf16> to vector<1x1x16x16xbf16>
    tpu.vector_store %arg5[%c0_55, %c11, %c0_56, %c0_57], %94 {strides = array<i32>} : memref<1x16x16x16xbf16, #tpu.memory_space<vmem>>, vector<1x1x16x16xbf16>,
    %95 = vector.extract_strided_slice %10 {offsets = [12, 0, 0], sizes = [1, 16, 16], strides = [1, 1, 1]} : vector<16x16x16xbf16> to vector<1x16x16xbf16>
    %96 = vector.shape_cast %95 : vector<1x16x16xbf16> to vector<16x16xbf16>
    %cst_58 = arith.constant dense<0.000000e+00> : vector<16x16xf32>
    %97 = tpu.matmul %1, %96, %cst_58 {dimension_numbers = #tpu.dot_dimension_numbers<[1], [0], [0], [1], [0, 0, 1, 1], [], []>} : vector<16x16xbf16>, vector<16x16xbf16>, vector<16x16xf32> -> vector<16x16xf32>
    %98 = arith.truncf %97 : vector<16x16xf32> to vector<16x16xbf16>
    %c0_59 = arith.constant 0 : index
    %c12 = arith.constant 12 : index
    %c0_60 = arith.constant 0 : index
    %c0_61 = arith.constant 0 : index
    %99 = vector.load %arg5[%c0_59, %c12, %c0_60, %c0_61] : memref<1x16x16x16xbf16, #tpu.memory_space<vmem>>, vector<1x1x16x16xbf16>
    %100 = vector.shape_cast %99 : vector<1x1x16x16xbf16> to vector<16x16xbf16>
    %101 = vector.shape_cast %98 : vector<16x16xbf16> to vector<1x1x16x16xbf16>
    tpu.vector_store %arg5[%c0_59, %c12, %c0_60, %c0_61], %101 {strides = array<i32>} : memref<1x16x16x16xbf16, #tpu.memory_space<vmem>>, vector<1x1x16x16xbf16>,
    %102 = vector.extract_strided_slice %10 {offsets = [13, 0, 0], sizes = [1, 16, 16], strides = [1, 1, 1]} : vector<16x16x16xbf16> to vector<1x16x16xbf16>
    %103 = vector.shape_cast %102 : vector<1x16x16xbf16> to vector<16x16xbf16>
    %cst_62 = arith.constant dense<0.000000e+00> : vector<16x16xf32>
    %104 = tpu.matmul %1, %103, %cst_62 {dimension_numbers = #tpu.dot_dimension_numbers<[1], [0], [0], [1], [0, 0, 1, 1], [], []>} : vector<16x16xbf16>, vector<16x16xbf16>, vector<16x16xf32> -> vector<16x16xf32>
    %105 = arith.truncf %104 : vector<16x16xf32> to vector<16x16xbf16>
    %c0_63 = arith.constant 0 : index
    %c13 = arith.constant 13 : index
    %c0_64 = arith.constant 0 : index
    %c0_65 = arith.constant 0 : index
    %106 = vector.load %arg5[%c0_63, %c13, %c0_64, %c0_65] : memref<1x16x16x16xbf16, #tpu.memory_space<vmem>>, vector<1x1x16x16xbf16>
    %107 = vector.shape_cast %106 : vector<1x1x16x16xbf16> to vector<16x16xbf16>
    %108 = vector.shape_cast %105 : vector<16x16xbf16> to vector<1x1x16x16xbf16>
    tpu.vector_store %arg5[%c0_63, %c13, %c0_64, %c0_65], %108 {strides = array<i32>} : memref<1x16x16x16xbf16, #tpu.memory_space<vmem>>, vector<1x1x16x16xbf16>,
    %109 = vector.extract_strided_slice %10 {offsets = [14, 0, 0], sizes = [1, 16, 16], strides = [1, 1, 1]} : vector<16x16x16xbf16> to vector<1x16x16xbf16>
    %110 = vector.shape_cast %109 : vector<1x16x16xbf16> to vector<16x16xbf16>
    %cst_66 = arith.constant dense<0.000000e+00> : vector<16x16xf32>
    %111 = tpu.matmul %1, %110, %cst_66 {dimension_numbers = #tpu.dot_dimension_numbers<[1], [0], [0], [1], [0, 0, 1, 1], [], []>} : vector<16x16xbf16>, vector<16x16xbf16>, vector<16x16xf32> -> vector<16x16xf32>
    %112 = arith.truncf %111 : vector<16x16xf32> to vector<16x16xbf16>
    %c0_67 = arith.constant 0 : index
    %c14 = arith.constant 14 : index
    %c0_68 = arith.constant 0 : index
    %c0_69 = arith.constant 0 : index
    %113 = vector.load %arg5[%c0_67, %c14, %c0_68, %c0_69] : memref<1x16x16x16xbf16, #tpu.memory_space<vmem>>, vector<1x1x16x16xbf16>
    %114 = vector.shape_cast %113 : vector<1x1x16x16xbf16> to vector<16x16xbf16>
    %115 = vector.shape_cast %112 : vector<16x16xbf16> to vector<1x1x16x16xbf16>
    tpu.vector_store %arg5[%c0_67, %c14, %c0_68, %c0_69], %115 {strides = array<i32>} : memref<1x16x16x16xbf16, #tpu.memory_space<vmem>>, vector<1x1x16x16xbf16>,
    %116 = vector.extract_strided_slice %10 {offsets = [15, 0, 0], sizes = [1, 16, 16], strides = [1, 1, 1]} : vector<16x16x16xbf16> to vector<1x16x16xbf16>
    %117 = vector.shape_cast %116 : vector<1x16x16xbf16> to vector<16x16xbf16>
    %cst_70 = arith.constant dense<0.000000e+00> : vector<16x16xf32>
    %118 = tpu.matmul %1, %117, %cst_70 {dimension_numbers = #tpu.dot_dimension_numbers<[1], [0], [0], [1], [0, 0, 1, 1], [], []>} : vector<16x16xbf16>, vector<16x16xbf16>, vector<16x16xf32> -> vector<16x16xf32>
    %119 = arith.truncf %118 : vector<16x16xf32> to vector<16x16xbf16>
    %c0_71 = arith.constant 0 : index
    %c15 = arith.constant 15 : index
    %c0_72 = arith.constant 0 : index
    %c0_73 = arith.constant 0 : index
    %120 = vector.load %arg5[%c0_71, %c15, %c0_72, %c0_73] : memref<1x16x16x16xbf16, #tpu.memory_space<vmem>>, vector<1x1x16x16xbf16>
    %121 = vector.shape_cast %120 : vector<1x1x16x16xbf16> to vector<16x16xbf16>
    %122 = vector.shape_cast %119 : vector<16x16xbf16> to vector<1x1x16x16xbf16>
    tpu.vector_store %arg5[%c0_71, %c15, %c0_72, %c0_73], %122 {strides = array<i32>} : memref<1x16x16x16xbf16, #tpu.memory_space<vmem>>, vector<1x1x16x16xbf16>,
    return
  }
  func.func @transform_0(%arg0: i32, %arg1: i32) -> (i32, i32, i32, i32) {
    %c0_i32 = arith.constant 0 : i32
    %c0_i32_0 = arith.constant 0 : i32
    %c0_i32_1 = arith.constant 0 : i32
    return %arg0, %arg1, %c0_i32, %c0_i32_0 : i32, i32, i32, i32
  }
  func.func @transform_1(%arg0: i32, %arg1: i32) -> (i32, i32, i32) {
    %c0_i32 = arith.constant 0 : i32
    %c0_i32_0 = arith.constant 0 : i32
    %c0_i32_1 = arith.constant 0 : i32
    return %arg0, %c0_i32, %c0_i32_0 : i32, i32, i32
  }
  func.func @transform_2(%arg0: i32, %arg1: i32) -> (i32, i32, i32) {
    %c0_i32 = arith.constant 0 : i32
    %c0_i32_0 = arith.constant 0 : i32
    %c0_i32_1 = arith.constant 0 : i32
    return %arg0, %c0_i32, %c0_i32_0 : i32, i32, i32
  }
  func.func @transform_3(%arg0: i32, %arg1: i32) -> (i32, i32, i32, i32) {
    %c0_i32 = arith.constant 0 : i32
    %c0_i32_0 = arith.constant 0 : i32
    %c0_i32_1 = arith.constant 0 : i32
    return %arg0, %arg1, %c0_i32, %c0_i32_0 : i32, i32, i32, i32
  }
}

module attributes {stable_mosaic.version = 11 : i64} {
  func.func @_warp_d_rescale_kernel(%arg0: i32, %arg1: i32, %arg2: memref<1x1x8x256xbf16, #tpu.memory_space<vmem>>, %arg3: memref<1x8x8xbf16, #tpu.memory_space<vmem>>, %arg4: memref<1x1x8x256xf32, #tpu.memory_space<vmem>>) attributes {dimension_semantics = [#tpu.dimension_semantics<parallel>, #tpu.dimension_semantics<parallel>], iteration_bounds = array<i64: 2, 4>, scalar_prefetch = 0 : i64, scratch_operands = 0 : i64, tpu.core_type = #tpu.core_type<tc>, window_params = [{transform_indices = @transform_0, window_bounds = array<i64: 1, 1, 8, 256>}, {transform_indices = @transform_1, window_bounds = array<i64: 1, 8, 8>}, {transform_indices = @transform_2, window_bounds = array<i64: 1, 1, 8, 256>}]} {
    %c0 = arith.constant 0 : index
    %c0_0 = arith.constant 0 : index
    %c0_1 = arith.constant 0 : index
    %0 = vector.load %arg3[%c0, %c0_0, %c0_1] : memref<1x8x8xbf16, #tpu.memory_space<vmem>>, vector<1x8x8xbf16>
    %1 = vector.shape_cast %0 : vector<1x8x8xbf16> to vector<8x8xbf16>
    %c0_2 = arith.constant 0 : index
    %c0_3 = arith.constant 0 : index
    %c0_4 = arith.constant 0 : index
    %c0_5 = arith.constant 0 : index
    %2 = vector.load %arg2[%c0_2, %c0_3, %c0_4, %c0_5] : memref<1x1x8x256xbf16, #tpu.memory_space<vmem>>, vector<1x1x8x256xbf16>
    %3 = vector.shape_cast %2 : vector<1x1x8x256xbf16> to vector<8x256xbf16>
    %cst = arith.constant dense<0.000000e+00> : vector<8x256xf32>
    %4 = tpu.matmul %1, %3, %cst {dimension_numbers = #tpu.dot_dimension_numbers<[1], [0], [0], [1], [0, 0, 1, 1], [], []>} : vector<8x8xbf16>, vector<8x256xbf16>, vector<8x256xf32> -> vector<8x256xf32>
    %5 = vector.shape_cast %4 : vector<8x256xf32> to vector<1x8x256xf32>
    %cst_6 = arith.constant dense<0x7F800000> : vector<1xf32>
    %6 = vector.multi_reduction <minimumf>, %5, %cst_6 [1, 2] : vector<1x8x256xf32> to vector<1xf32>
    %7 = vector.shape_cast %6 : vector<1xf32> to vector<1x1x1xf32>
    %8 = vector.extract %7[0, 0, 0] : f32 from vector<1x1x1xf32>
    %9 = vector.shape_cast %4 : vector<8x256xf32> to vector<1x8x256xf32>
    %cst_7 = arith.constant dense<0xFF800000> : vector<1xf32>
    %10 = vector.multi_reduction <maximumf>, %9, %cst_7 [1, 2] : vector<1x8x256xf32> to vector<1xf32>
    %11 = vector.shape_cast %10 : vector<1xf32> to vector<1x1x1xf32>
    %12 = vector.extract %11[0, 0, 0] : f32 from vector<1x1x1xf32>
    %13 = arith.subf %12, %8 : f32
    %cst_8 = arith.constant 0.000000e+00 : f32
    %14 = arith.cmpf ogt, %13, %cst_8 : f32
    %cst_9 = arith.constant 1.000000e+00 : f32
    %15 = arith.select %14, %13, %cst_9 : f32
    %cst_10 = arith.constant 1.000000e+00 : f32
    %16 = arith.divf %cst_10, %15 : f32
    %17 = vector.broadcast %8 : f32 to vector<8x256xf32>
    %18 = arith.subf %4, %17 : vector<8x256xf32>
    %19 = vector.broadcast %16 : f32 to vector<8x256xf32>
    %20 = arith.mulf %18, %19 : vector<8x256xf32>
    %c0_11 = arith.constant 0 : index
    %c0_12 = arith.constant 0 : index
    %c0_13 = arith.constant 0 : index
    %c0_14 = arith.constant 0 : index
    %21 = vector.load %arg4[%c0_11, %c0_12, %c0_13, %c0_14] : memref<1x1x8x256xf32, #tpu.memory_space<vmem>>, vector<1x1x8x256xf32>
    %22 = vector.shape_cast %21 : vector<1x1x8x256xf32> to vector<8x256xf32>
    %23 = vector.shape_cast %20 : vector<8x256xf32> to vector<1x1x8x256xf32>
    tpu.vector_store %arg4[%c0_11, %c0_12, %c0_13, %c0_14], %23 {strides = array<i32>} : memref<1x1x8x256xf32, #tpu.memory_space<vmem>>, vector<1x1x8x256xf32>,
    return
  }
  func.func @transform_0(%arg0: i32, %arg1: i32) -> (i32, i32, i32, i32) {
    %c0_i32 = arith.constant 0 : i32
    %c0_i32_0 = arith.constant 0 : i32
    %c0_i32_1 = arith.constant 0 : i32
    return %arg0, %arg1, %c0_i32, %c0_i32_0 : i32, i32, i32, i32
  }
  func.func @transform_1(%arg0: i32, %arg1: i32) -> (i32, i32, i32) {
    %c0_i32 = arith.constant 0 : i32
    %c0_i32_0 = arith.constant 0 : i32
    %c0_i32_1 = arith.constant 0 : i32
    return %arg0, %c0_i32, %c0_i32_0 : i32, i32, i32
  }
  func.func @transform_2(%arg0: i32, %arg1: i32) -> (i32, i32, i32, i32) {
    %c0_i32 = arith.constant 0 : i32
    %c0_i32_0 = arith.constant 0 : i32
    %c0_i32_1 = arith.constant 0 : i32
    return %arg0, %arg1, %c0_i32, %c0_i32_0 : i32, i32, i32, i32
  }
}

</mosaic_0001>

<llo_original>
// kernel: training_augments.3
$region0: #{training_augments.3}
  #allocation0 [shape = 'u32[]', space=smem, size = 0x4, offset = 0x4, fixed_abs, tag = 'smem constant byte address 0x4 - core index']
  #allocation1 [shape = 'u32[72,128]{1,0:T(1,128)}', space=vmem, size = 0x9000, scoped, tag = 'internal scratch']
  %s0 = inlined_call_operand.vmem [shape: bf16[2,4,8,256], index: 0, kind: input, shape index: {}]
  %s1 = inlined_call_operand.vmem [shape: bf16[2,8,8], index: 1, kind: input, shape index: {}]
  %s2 = inlined_call_operand.vmem [shape: f32[2,4,8,256], index: 2, kind: output, shape index: {}]
  %s3 = sld [smem:[#allocation0]]
  $region41: #{training_augments.3} parent=0
    _
  %s5 = ssub.s32 1, %s3
  %s6 = scalar_select 0, %s5, %s3
  loop: start=0, step=1, limit=10
  $region2: #{training_augments.3} parent=0 // loop_pre_header
    _
  $region3: #{training_augments.3} parent=0 // loop_header
    %s8 = sphi 0, %s12
    %p9 = scmp.ge.s32.totalorder %s8, 10
    %s15 = sphi 0, %s27
    %s16 = sphi 0, %s23
    %s17 = sphi 0, %s15
    %s18 = sphi 0, %s16
    %s19 = sphi 0, %s17
    %s20 = sphi 0, %s18
    %s32 = sphi 0, %s34
    %s35 = sphi 0, %s32
    %s36 = sphi 0, %s35
    %s52 = sphi 0, %s36
    %s58 = sphi 0, %s60
    %s61 = sphi 0, %s58
    %s62 = sphi 0, %s61
    %s78 = sphi 0, %s62
    %s86 = sphi 0, %s88
    %s89 = sphi 0, %s86
    %s90 = sphi 0, %s89
    %s106 = sphi 0, %s90
  $region4: #{training_augments.3} parent=0 // loop_header_branch
    %11 = sbr.rel (%p9) target = $region8
  $region5: #{training_augments.3} parent=0 // loop_body
    %s13 = ssub.s32 %s8, 1
    %s14 = ssub.s32 %s8, 2
    %s21 = sadd.s32 1, %s16
    %p22 = scmp.ge.s32.totalorder %s21, 4
    %s23 = scalar_select %p22, 0, %s21
    %s24 = sadd.s32 1, %s15
    %s25 = scalar_select %p22, %s24, %s15
    %p26 = scmp.ge.s32.totalorder %s25, 2
    %s27 = scalar_select %p26, 0, %s25
    %s28 = ssub.s32 %s15, %s27
    %s29 = ssub.s32 %s16, %s23
    %s30 = sor.u32 %s28, %s29
    %p31 = scmp.eq.s32.totalorder %s30, 0
    %s33 = sadd.s32 %s32, 1
    %s34 = scalar_select %p31, %s32, %s33
    %p37 = pneg %p31
    %p38 = scmp.eq.s32.totalorder %s8, 7
    %p39 = por %p37, %p38
    %p40 = scmp.ne.s32.totalorder %s32, %s35
    %p41 = scmp.eq.s32.totalorder %s8, 0
    %p42 = por %p40, %p41
    %p43 = scmp.ne.s32.totalorder %s32, %s35
    %p44 = scmp.eq.s32.totalorder %s13, 7
    %p45 = por %p43, %p44
    %p46 = scmp.ne.s32.totalorder %s35, %s36
    %p47 = scmp.eq.s32.totalorder %s13, 0
    %p48 = por %p46, %p47
    %p49 = scmp.ne.s32.totalorder %s35, %s36
    %p50 = scmp.eq.s32.totalorder %s14, 7
    %p51 = por %p49, %p50
    %p53 = scmp.ne.s32.totalorder %s36, %s52
    %p54 = scmp.eq.s32.totalorder %s14, 0
    %p55 = por %p53, %p54
    %s56 = ssub.s32 %s15, %s27
    %p57 = scmp.eq.s32.totalorder %s56, 0
    %s59 = sadd.s32 %s58, 1
    %s60 = scalar_select %p57, %s58, %s59
    %p63 = pneg %p57
    %p64 = scmp.eq.s32.totalorder %s8, 7
    %p65 = por %p63, %p64
    %p66 = scmp.ne.s32.totalorder %s58, %s61
    %p67 = scmp.eq.s32.totalorder %s8, 0
    %p68 = por %p66, %p67
    %p69 = scmp.ne.s32.totalorder %s58, %s61
    %p70 = scmp.eq.s32.totalorder %s13, 7
    %p71 = por %p69, %p70
    %p72 = scmp.ne.s32.totalorder %s61, %s62
    %p73 = scmp.eq.s32.totalorder %s13, 0
    %p74 = por %p72, %p73
    %p75 = scmp.ne.s32.totalorder %s61, %s62
    %p76 = scmp.eq.s32.totalorder %s14, 7
    %p77 = por %p75, %p76
    %p79 = scmp.ne.s32.totalorder %s62, %s78
    %p80 = scmp.eq.s32.totalorder %s14, 0
    %p81 = por %p79, %p80
    %s82 = ssub.s32 %s15, %s27
    %s83 = ssub.s32 %s16, %s23
    %s84 = sor.u32 %s82, %s83
    %p85 = scmp.eq.s32.totalorder %s84, 0
    %s87 = sadd.s32 %s86, 1
    %s88 = scalar_select %p85, %s86, %s87
    %p91 = pneg %p85
    %p92 = scmp.eq.s32.totalorder %s8, 7
    %p93 = por %p91, %p92
    %p94 = scmp.ne.s32.totalorder %s86, %s89
    %p95 = scmp.eq.s32.totalorder %s8, 0
    %p96 = por %p94, %p95
    %p97 = scmp.ne.s32.totalorder %s86, %s89
    %p98 = scmp.eq.s32.totalorder %s13, 7
    %p99 = por %p97, %p98
    %p100 = scmp.ne.s32.totalorder %s89, %s90
    %p101 = scmp.eq.s32.totalorder %s13, 0
    %p102 = por %p100, %p101
    %p103 = scmp.ne.s32.totalorder %s89, %s90
    %p104 = scmp.eq.s32.totalorder %s14, 7
    %p105 = por %p103, %p104
    %p107 = scmp.ne.s32.totalorder %s90, %s106
    %p108 = scmp.eq.s32.totalorder %s14, 0
    %p109 = por %p107, %p108
    %p110 = scmp.le.s32.totalorder 1, %s8
    %p111 = scmp.lt.s32.totalorder %s8, 9
    %p112 = pnand %p110, %p111
    %p113 = pneg %p112
    // Predicated region
    $region9: #{training_augments.3} parent=5 // pred_check
      _
    $region10: #{training_augments.3} parent=5 // pred_check_branch
      %115 = sbr.rel (%p112) target = $region12
    $region11: #{training_augments.3} parent=5 // pred_region
      %s116 = ssub.s32 %s8, 1
    $region12: #{training_augments.3} parent=5 // pred_fallthru
      _
    %p117 = scmp.lt.s32.totalorder %s8, 8
    // Predicated region
    $region13: #{training_augments.3} parent=5 // pred_check
      %p118 = pneg %p117
    $region14: #{training_augments.3} parent=5 // pred_check_branch
      %120 = sbr.rel (%p118) target = $region16
    $region15: #{training_augments.3} parent=5 // pred_region
      // Predicated region
      $region17: #{training_augments.3} parent=15 // pred_check
        %p121 = pneg %p42
      $region18: #{training_augments.3} parent=15 // pred_check_branch
        %123 = sbr.rel (%p121) target = $region20
      $region19: #{training_augments.3} parent=15 // pred_region
        %p124 = scmp.lt.s32.totalorder %s15, 1
        %s125 = scalar_select %p124, %s15, 1
        %p126 = scmp.lt.s32.totalorder %s16, 3
        %s127 = scalar_select %p126, %s16, 3
        %s128 = smul.addr %s127, 2
        %s129 = smul.addr %s125, 8
        %s130 = sadd.s32 %s128, %s129
        %s131 = smul.addr %s130, 4
        %s132 = scalar_lea.vmem %s0, %s131
      $region20: #{training_augments.3} parent=15 // pred_fallthru
        _
      // Predicated region
      $region21: #{training_augments.3} parent=15 // pred_check
        %p133 = pneg %p68
      $region22: #{training_augments.3} parent=15 // pred_check_branch
        %135 = sbr.rel (%p133) target = $region24
      $region23: #{training_augments.3} parent=15 // pred_region
        %p136 = scmp.lt.s32.totalorder %s15, 1
        %s137 = scalar_select %p136, %s15, 1
        %s138 = smul.addr %s137, 4
        %s139 = scalar_lea.vmem %s1, %s138
      $region24: #{training_augments.3} parent=15 // pred_fallthru
        _
    $region16: #{training_augments.3} parent=5 // pred_fallthru
      _
    %p140 = scmp.le.s32.totalorder 1, %s8
    %p141 = scmp.lt.s32.totalorder %s8, 9
    %p142 = pnand %p140, %p141
    %p143 = pneg %p142
    // Predicated region
    $region25: #{training_augments.3} parent=5 // pred_check
      _
    $region26: #{training_augments.3} parent=5 // pred_check_branch
      %145 = sbr.rel (%p142) target = $region28
    $region27: #{training_augments.3} parent=5 // pred_region
      %s146 = ssub.s32 %s8, 1
      %p147 = scmp.lt.s32.totalorder %s17, 1
      %s148 = scalar_select %p147, %s17, 1
      %p149 = scmp.lt.s32.totalorder %s18, 3
      %s150 = scalar_select %p149, %s18, 3
      %s151 = smul.addr %s150, 2
      %s152 = smul.addr %s148, 8
      %s153 = sadd.s32 %s151, %s152
      %s154 = smul.addr %s153, 4
      %s155 = scalar_lea.vmem %s0, %s154
      %p156 = pneg %p48
      %p157 = pneg %p45
      %p158 = scmp.lt.s32.totalorder %s17, 1
      %s159 = scalar_select %p158, %s17, 1
      %s160 = smul.addr %s159, 4
      %s161 = scalar_lea.vmem %s1, %s160
      %p162 = pneg %p74
      %p163 = pneg %p71
      %p164 = pneg %p102
      %p165 = pneg %p99
      %p166 = scmp.lt.s32.totalorder %s17, 1
      %s167 = scalar_select %p166, %s17, 1
      %p168 = scmp.lt.s32.totalorder %s18, 3
      %s169 = scalar_select %p168, %s18, 3
      %s170 = smul.addr %s169, 2
      %s171 = smul.addr %s167, 8
      %s172 = sadd.s32 %s170, %s171
      %s173 = smul.addr %s172, 8
      %s174 = scalar_lea.vmem %s2, %s173
      %p175 = scmp.lt.s32.totalorder %s17, 1
      %s176 = scalar_select %p175, %s17, 1
      %p177 = scmp.lt.s32.totalorder %s18, 3
      %s178 = scalar_select %p177, %s18, 3
      %s179 = smul.addr %s178, 2
      %s180 = smul.addr %s176, 8
      %s181 = sadd.s32 %s179, %s180
      %s182 = smul.addr %s181, 4
      %s183 = scalar_lea.vmem %s0, %s182
      %p184 = scmp.lt.s32.totalorder %s17, 1
      %s185 = scalar_select %p184, %s17, 1
      %s186 = smul.addr %s185, 4
      %s187 = scalar_lea.vmem %s1, %s186
      %p188 = scmp.lt.s32.totalorder %s17, 1
      %s189 = scalar_select %p188, %s17, 1
      %p190 = scmp.lt.s32.totalorder %s18, 3
      %s191 = scalar_select %p190, %s18, 3
      %s192 = smul.addr %s191, 2
      %s193 = smul.addr %s189, 8
      %s194 = sadd.s32 %s192, %s193
      %s195 = smul.addr %s194, 8
      %s196 = scalar_lea.vmem %s2, %s195
      %v198 = vld [vmem:[%s187] sm:$0xf]
      %v199 = vld [vmem:[%s183] sm:$0xff]
      %v201 = vunpack.c.l.b16 %v199
      %v202 = vunpack.c.h.b16 %v199
      %v203 = vpack.c.b16 %v201, %v201
      %v204 = vpack.c.b16 %v202, %v202
      %vm205 = vcmask 64512
      %v207 = vsel %vm205, %v198, 0
      %vm209 = vcmask 1043456
      %v211 = vsel %vm209, %v203, 0
      %v214 = vsel %vm209, %v204, 0
      %216 = vmatpush.bf16.msra.mxu0 0
      %217 = vmatpush.bf16.msra.mxu0 0
      %218 = vmatpush.bf16.msra.mxu0 0
      %219 = vmatpush.bf16.msra.mxu0 0
      %220 = vmatpush.bf16.msra.mxu0 0
      %221 = vmatpush.bf16.msra.mxu0 0
      %222 = vmatpush.bf16.msra.mxu0 0
      %223 = vmatpush.bf16.msra.mxu0 %v211
      %224 = vmatmul.bf16.gmra.mxu0 %v207
      %v225 = vpop.f32.mrf.mxu0
      %v226 = vadd.f32 0.0, %v225
      %v227 = vpop.f32.mrf.mxu0
      %228 = vdwg.mxu0
      %229 = vmatpush.bf16.msra.mxu0 0
      %230 = vmatpush.bf16.msra.mxu0 0
      %231 = vmatpush.bf16.msra.mxu0 0
      %232 = vmatpush.bf16.msra.mxu0 0
      %233 = vmatpush.bf16.msra.mxu0 0
      %234 = vmatpush.bf16.msra.mxu0 0
      %235 = vmatpush.bf16.msra.mxu0 0
      %236 = vmatpush.bf16.msra.mxu0 %v214
      %237 = vmatmul.bf16.gmra.mxu0 %v207
      %v238 = vpop.f32.mrf.mxu0
      %v239 = vadd.f32 0.0, %v238
      %v240 = vpop.f32.mrf.mxu0
      %241 = vdwg.mxu0
      %v242 = vmin.f32 %v226, %v239
      %243 = vmin.xlane.f32.xlu0 %v242
      %v244 = vpop.xlane.xlu0 %243
      %v245 = vrot.slane %v244, 4
      %v246 = vmin.f32 %v244, %v245
      %v247 = vrot.slane %v246, 2
      %v248 = vmin.f32 %v246, %v247
      %v249 = vrot.slane %v248, 1
      %v250 = vmin.f32 %v248, %v249
      %s251 = vtos %v250
      %v252 = vmax.f32 %v226, %v239
      %253 = vmax.xlane.f32.xlu0 %v252
      %v254 = vpop.xlane.xlu0 %253
      %v255 = vrot.slane %v254, 4
      %v256 = vmax.f32 %v254, %v255
      %v257 = vrot.slane %v256, 2
      %v258 = vmax.f32 %v256, %v257
      %v259 = vrot.slane %v258, 1
      %v260 = vmax.f32 %v258, %v259
      %s261 = vtos %v260
      %s262 = ssub.f32 %s261, %s251
      %p263 = scmp.gt.f32.partialorder %s262, 0.0
      %s264 = scalar_select %p263, %s262, 1.0
      %v265 = vstv %s264
      %v266 = vrcp.pop %v265
      %v267 = vmul.f32 %v265, %v266
      %v268 = vsub.f32 1.0, %v267
      %v269 = vmul.f32 %v266, %v268
      %v270 = vadd.f32 %v266, %v269
      %vm271 = vweird.f32 %v265
      %vm272 = vweird.f32 %v266
      %vm273 = vmor %vm271, %vm272
      %v274 = vsel %vm273, %v266, %v270
      %v275 = vand.u32 2147483647, %v265
      %vm276 = vcmp.eq.f32.partialorder %v275, 8.507059e+37
      %v277 = vand.u32 %v265, 2147483648
      %v278 = vor.u32 1.1754944e-38, %v277
      %v279 = vsel %vm276, %v278, %v274
      %s280 = vtos %v279
      %v281 = vstv %s251
      %v282 = vsub.f32 %v226, %v281
      %v283 = vsub.f32 %v239, %v281
      %v284 = vstv %s280
      %v285 = vmul.f32 %v282, %v284
      %v286 = vmul.f32 %v283, %v284
      %287 = vst [vmem:[%s196] sm:$0xff] %v285
      %288 = vst [vmem:[%s196 + $0x8] sm:$0xff] %v286
      %p289 = scmp.lt.s32.totalorder %s17, 1
      %s290 = scalar_select %p289, %s17, 1
      %p291 = scmp.lt.s32.totalorder %s18, 3
      %s292 = scalar_select %p291, %s18, 3
      %s293 = smul.addr %s292, 2
      %s294 = smul.addr %s290, 8
      %s295 = sadd.s32 %s293, %s294
      %s296 = smul.addr %s295, 8
      %s297 = scalar_lea.vmem %s2, %s296
      // Predicated region
      $region29: #{training_augments.3} parent=27 // pred_check
        %p298 = pneg %p99
      $region30: #{training_augments.3} parent=27 // pred_check_branch
        %300 = sbr.rel (%p298) target = $region32
      $region31: #{training_augments.3} parent=27 // pred_region
        _
      $region32: #{training_augments.3} parent=27 // pred_fallthru
        _
    $region28: #{training_augments.3} parent=5 // pred_fallthru
      _
    %p301 = scmp.le.s32.totalorder 2, %s8
    // Predicated region
    $region33: #{training_augments.3} parent=5 // pred_check
      %p302 = pneg %p301
    $region34: #{training_augments.3} parent=5 // pred_check_branch
      %304 = sbr.rel (%p302) target = $region36
    $region35: #{training_augments.3} parent=5 // pred_region
      %s305 = ssub.s32 %s8, 2
      // Predicated region
      $region37: #{training_augments.3} parent=35 // pred_check
        %p306 = pneg %p105
      $region38: #{training_augments.3} parent=35 // pred_check_branch
        %308 = sbr.rel (%p306) target = $region40
      $region39: #{training_augments.3} parent=35 // pred_region
        %p309 = scmp.lt.s32.totalorder %s19, 1
        %s310 = scalar_select %p309, %s19, 1
        %p311 = scmp.lt.s32.totalorder %s20, 3
        %s312 = scalar_select %p311, %s20, 3
        %s313 = smul.addr %s312, 2
        %s314 = smul.addr %s310, 8
        %s315 = sadd.s32 %s313, %s314
        %s316 = smul.addr %s315, 8
        %s317 = scalar_lea.vmem %s2, %s316
      $region40: #{training_augments.3} parent=35 // pred_fallthru
        _
    $region36: #{training_augments.3} parent=5 // pred_fallthru
      _
  $region6: #{training_augments.3} parent=0 // loop_footer
    %s12 = sadd.s32 1, %s8
  $region7: #{training_augments.3} parent=0 // loop_footer_branch
    %7 = sbr.rel target = $region3
  $region8: #{training_augments.3} parent=0 // loop_exit
    _

// kernel: training_augments.2
$region0: #{training_augments.2}
  #allocation0 [shape = 'u32[]', space=smem, size = 0x4, offset = 0x4, fixed_abs, tag = 'smem constant byte address 0x4 - core index']
  #allocation1 [shape = 'u32[72,128]{1,0:T(1,128)}', space=vmem, size = 0x9000, scoped, tag = 'internal scratch']
  %s0 = inlined_call_operand.hbm [shape: f32[2,32,16,16], index: 0, kind: input, shape index: {}]
  %s1 = inlined_call_operand.vmem [shape: bf16[2,16,16], index: 1, kind: input, shape index: {}]
  %s2 = inlined_call_operand.vmem [shape: bf16[2,16,16], index: 2, kind: input, shape index: {}]
  %s3 = inlined_call_operand.vmem [shape: bf16[2,32,16,16], index: 3, kind: output, shape index: {}]
  %s4 = sld [smem:[#allocation0]]
  $region49: #{training_augments.2} parent=0
    _
  %s6 = ssub.s32 1, %s4
  %s7 = scalar_select 0, %s6, %s4
  $region1: #{training_augments.2} parent=0
    #allocation2 [shape = 'u8[262144]{0}', space=vmem, size = 0x40000, scoped, tag = 'input window, operand 0']
    #allocation3 [shape = 's32[2]{0}', space=sflag, size = 0x8, scoped, tag = 'scoped memory for training_augments.2']
    %8 = vsyncpa [#allocation3], 0
    %s9 = scalar_lea.sflag [#allocation3], 1
    %10 = vsyncpa %s9, 0
    loop: start=0, step=1, limit=6
    $region2: #{training_augments.2} parent=1 // loop_pre_header
      _
    $region3: #{training_augments.2} parent=1 // loop_header
      %s12 = sphi 0, %s16
      %p13 = scmp.ge.s32.totalorder %s12, 6
      %s19 = sphi 0, %s31
      %s20 = sphi 0, %s27
      %s21 = sphi 0, %s19
      %s22 = sphi 0, %s20
      %s23 = sphi 0, %s21
      %s24 = sphi 0, %s22
      %s36 = sphi 0, %s38
      %s39 = sphi 0, %s36
      %s40 = sphi 0, %s39
      %s56 = sphi 0, %s40
      %s62 = sphi 0, %s64
      %s65 = sphi 0, %s62
      %s66 = sphi 0, %s65
      %s82 = sphi 0, %s66
      %s88 = sphi 0, %s90
      %s91 = sphi 0, %s88
      %s92 = sphi 0, %s91
      %s108 = sphi 0, %s92
      %s116 = sphi 0, %s118
      %s119 = sphi 0, %s116
      %s120 = sphi 0, %s119
      %s136 = sphi 0, %s120
    $region4: #{training_augments.2} parent=1 // loop_header_branch
      %15 = sbr.rel (%p13) target = $region8
    $region5: #{training_augments.2} parent=1 // loop_body
      %s17 = ssub.s32 %s12, 1
      %s18 = ssub.s32 %s12, 2
      %s25 = sadd.s32 1, %s20
      %p26 = scmp.ge.s32.totalorder %s25, 2
      %s27 = scalar_select %p26, 0, %s25
      %s28 = sadd.s32 1, %s19
      %s29 = scalar_select %p26, %s28, %s19
      %p30 = scmp.ge.s32.totalorder %s29, 2
      %s31 = scalar_select %p30, 0, %s29
      %s32 = ssub.s32 %s19, %s31
      %s33 = ssub.s32 %s20, %s27
      %s34 = sor.u32 %s32, %s33
      %p35 = scmp.eq.s32.totalorder %s34, 0
      %s37 = sadd.s32 %s36, 1
      %s38 = scalar_select %p35, %s36, %s37
      %p41 = pneg %p35
      %p42 = scmp.eq.s32.totalorder %s12, 3
      %p43 = por %p41, %p42
      %p44 = scmp.ne.s32.totalorder %s36, %s39
      %p45 = scmp.eq.s32.totalorder %s12, 0
      %p46 = por %p44, %p45
      %p47 = scmp.ne.s32.totalorder %s36, %s39
      %p48 = scmp.eq.s32.totalorder %s17, 3
      %p49 = por %p47, %p48
      %p50 = scmp.ne.s32.totalorder %s39, %s40
      %p51 = scmp.eq.s32.totalorder %s17, 0
      %p52 = por %p50, %p51
      %p53 = scmp.ne.s32.totalorder %s39, %s40
      %p54 = scmp.eq.s32.totalorder %s18, 3
      %p55 = por %p53, %p54
      %p57 = scmp.ne.s32.totalorder %s40, %s56
      %p58 = scmp.eq.s32.totalorder %s18, 0
      %p59 = por %p57, %p58
      %s60 = ssub.s32 %s19, %s31
      %p61 = scmp.eq.s32.totalorder %s60, 0
      %s63 = sadd.s32 %s62, 1
      %s64 = scalar_select %p61, %s62, %s63
      %p67 = pneg %p61
      %p68 = scmp.eq.s32.totalorder %s12, 3
      %p69 = por %p67, %p68
      %p70 = scmp.ne.s32.totalorder %s62, %s65
      %p71 = scmp.eq.s32.totalorder %s12, 0
      %p72 = por %p70, %p71
      %p73 = scmp.ne.s32.totalorder %s62, %s65
      %p74 = scmp.eq.s32.totalorder %s17, 3
      %p75 = por %p73, %p74
      %p76 = scmp.ne.s32.totalorder %s65, %s66
      %p77 = scmp.eq.s32.totalorder %s17, 0
      %p78 = por %p76, %p77
      %p79 = scmp.ne.s32.totalorder %s65, %s66
      %p80 = scmp.eq.s32.totalorder %s18, 3
      %p81 = por %p79, %p80
      %p83 = scmp.ne.s32.totalorder %s66, %s82
      %p84 = scmp.eq.s32.totalorder %s18, 0
      %p85 = por %p83, %p84
      %s86 = ssub.s32 %s19, %s31
      %p87 = scmp.eq.s32.totalorder %s86, 0
      %s89 = sadd.s32 %s88, 1
      %s90 = scalar_select %p87, %s88, %s89
      %p93 = pneg %p87
      %p94 = scmp.eq.s32.totalorder %s12, 3
      %p95 = por %p93, %p94
      %p96 = scmp.ne.s32.totalorder %s88, %s91
      %p97 = scmp.eq.s32.totalorder %s12, 0
      %p98 = por %p96, %p97
      %p99 = scmp.ne.s32.totalorder %s88, %s91
      %p100 = scmp.eq.s32.totalorder %s17, 3
      %p101 = por %p99, %p100
      %p102 = scmp.ne.s32.totalorder %s91, %s92
      %p103 = scmp.eq.s32.totalorder %s17, 0
      %p104 = por %p102, %p103
      %p105 = scmp.ne.s32.totalorder %s91, %s92
      %p106 = scmp.eq.s32.totalorder %s18, 3
      %p107 = por %p105, %p106
      %p109 = scmp.ne.s32.totalorder %s92, %s108
      %p110 = scmp.eq.s32.totalorder %s18, 0
      %p111 = por %p109, %p110
      %s112 = ssub.s32 %s19, %s31
      %s113 = ssub.s32 %s20, %s27
      %s114 = sor.u32 %s112, %s113
      %p115 = scmp.eq.s32.totalorder %s114, 0
      %s117 = sadd.s32 %s116, 1
      %s118 = scalar_select %p115, %s116, %s117
      %p121 = pneg %p115
      %p122 = scmp.eq.s32.totalorder %s12, 3
      %p123 = por %p121, %p122
      %p124 = scmp.ne.s32.totalorder %s116, %s119
      %p125 = scmp.eq.s32.totalorder %s12, 0
      %p126 = por %p124, %p125
      %p127 = scmp.ne.s32.totalorder %s116, %s119
      %p128 = scmp.eq.s32.totalorder %s17, 3
      %p129 = por %p127, %p128
      %p130 = scmp.ne.s32.totalorder %s119, %s120
      %p131 = scmp.eq.s32.totalorder %s17, 0
      %p132 = por %p130, %p131
      %p133 = scmp.ne.s32.totalorder %s119, %s120
      %p134 = scmp.eq.s32.totalorder %s18, 3
      %p135 = por %p133, %p134
      %p137 = scmp.ne.s32.totalorder %s120, %s136
      %p138 = scmp.eq.s32.totalorder %s18, 0
      %p139 = por %p137, %p138
      %p140 = scmp.le.s32.totalorder 1, %s12
      %p141 = scmp.lt.s32.totalorder %s12, 5
      %p142 = pnand %p140, %p141
      %p143 = pneg %p142
      // Predicated region
      $region9: #{training_augments.2} parent=5 // pred_check
        _
      $region10: #{training_augments.2} parent=5 // pred_check_branch
        %145 = sbr.rel (%p142) target = $region12
      $region11: #{training_augments.2} parent=5 // pred_region
        %s146 = ssub.s32 %s12, 1
      $region12: #{training_augments.2} parent=5 // pred_fallthru
        _
      %p147 = scmp.lt.s32.totalorder %s12, 4
      // Predicated region
      $region13: #{training_augments.2} parent=5 // pred_check
        %p148 = pneg %p147
      $region14: #{training_augments.2} parent=5 // pred_check_branch
        %150 = sbr.rel (%p148) target = $region16
      $region15: #{training_augments.2} parent=5 // pred_region
        // Predicated region
        $region17: #{training_augments.2} parent=15 // pred_check
          %p151 = pneg %p46
        $region18: #{training_augments.2} parent=15 // pred_check_branch
          %153 = sbr.rel (%p151) target = $region20
        $region19: #{training_augments.2} parent=15 // pred_region
          %s154 = sand.u32 %s36, 1
          %s155 = scalar_lea.sflag [#allocation3], %s154
          %s156 = sand.u32 %s36, 1
          %s157 = smul.addr %s156, 256
          %s158 = scalar_lea.vmem [#allocation2], %s157
          %s159 = smul.u32 16, %s20
          %161 = vsyncadd %s155, 0
          %s162 = smul.addr %s159, 2
          %s163 = smul.addr %s19, 64
          %s164 = sadd.s32 %s162, %s163
          %s165 = smul.addr %s164, 8
          %s166 = scalar_lea.hbm %s0, %s165
          %s167 = sshll.u32 %s166, 4
          %s168 = int_to_ptr.hbm [resolvable:$true] %s167
          %s169 = sshll.u32 %s158, 4
          %s170 = int_to_ptr.vmem [resolvable:$true] %s169
          %175 = dma.hbm_to_vmem [thread:$0]  %s168, 4096, %s170, %s155, 128, 128, 8
        $region20: #{training_augments.2} parent=15 // pred_fallthru
          _
        // Predicated region
        $region21: #{training_augments.2} parent=15 // pred_check
          %p176 = pneg %p72
        $region22: #{training_augments.2} parent=15 // pred_check_branch
          %178 = sbr.rel (%p176) target = $region24
        $region23: #{training_augments.2} parent=15 // pred_region
          %p179 = scmp.lt.s32.totalorder %s19, 1
          %s180 = scalar_select %p179, %s19, 1
          %s181 = smul.addr %s180, 2
          %s182 = smul.addr %s181, 4
          %s183 = scalar_lea.vmem %s1, %s182
        $region24: #{training_augments.2} parent=15 // pred_fallthru
          _
        // Predicated region
        $region25: #{training_augments.2} parent=15 // pred_check
          %p184 = pneg %p98
        $region26: #{training_augments.2} parent=15 // pred_check_branch
          %186 = sbr.rel (%p184) target = $region28
        $region27: #{training_augments.2} parent=15 // pred_region
          %p187 = scmp.lt.s32.totalorder %s19, 1
          %s188 = scalar_select %p187, %s19, 1
          %s189 = smul.addr %s188, 2
          %s190 = smul.addr %s189, 4
          %s191 = scalar_lea.vmem %s2, %s190
        $region28: #{training_augments.2} parent=15 // pred_fallthru
          _
      $region16: #{training_augments.2} parent=5 // pred_fallthru
        _
      %p192 = scmp.le.s32.totalorder 1, %s12
      %p193 = scmp.lt.s32.totalorder %s12, 5
      %p194 = pnand %p192, %p193
      %p195 = pneg %p194
      // Predicated region
      $region29: #{training_augments.2} parent=5 // pred_check
        _
      $region30: #{training_augments.2} parent=5 // pred_check_branch
        %197 = sbr.rel (%p194) target = $region32
      $region31: #{training_augments.2} parent=5 // pred_region
        %s198 = ssub.s32 %s12, 1
        %s199 = sand.u32 %s39, 1
        %s200 = scalar_lea.sflag [#allocation3], %s199
        %s201 = sand.u32 %s39, 1
        %s202 = smul.addr %s201, 256
        %s203 = scalar_lea.vmem [#allocation2], %s202
        // Predicated region
        $region33: #{training_augments.2} parent=31 // pred_check
          %p204 = pneg %p52
        $region34: #{training_augments.2} parent=31 // pred_check_branch
          %206 = sbr.rel (%p204) target = $region36
        $region35: #{training_augments.2} parent=31 // pred_region
          %208 = dma.done %s200, 4096
        $region36: #{training_augments.2} parent=31 // pred_fallthru
          _
        %s209 = sand.u32 %s39, 1
        %s210 = scalar_lea.sflag [#allocation3], %s209
        %s211 = sand.u32 %s39, 1
        %s212 = smul.addr %s211, 256
        %s213 = scalar_lea.vmem [#allocation2], %s212
        %p214 = pneg %p52
        %p215 = pneg %p49
        %p216 = scmp.lt.s32.totalorder %s21, 1
        %s217 = scalar_select %p216, %s21, 1
        %s218 = smul.addr %s217, 2
        %s219 = smul.addr %s218, 4
        %s220 = scalar_lea.vmem %s1, %s219
        %p221 = pneg %p78
        %p222 = pneg %p75
        %p223 = scmp.lt.s32.totalorder %s21, 1
        %s224 = scalar_select %p223, %s21, 1
        %s225 = smul.addr %s224, 2
        %s226 = smul.addr %s225, 4
        %s227 = scalar_lea.vmem %s2, %s226
        %p228 = pneg %p104
        %p229 = pneg %p101
        %p230 = pneg %p132
        %p231 = pneg %p129
        %s232 = smul.u32 16, %s22
        %p233 = scmp.lt.s32.totalorder %s21, 1
        %s234 = scalar_select %p233, %s21, 1
        %p235 = scmp.lt.s32.totalorder %s232, 31
        %s236 = scalar_select %p235, %s232, 31
        %s237 = smul.addr %s236, 2
        %s238 = smul.addr %s234, 64
        %s239 = sadd.s32 %s237, %s238
        %s240 = smul.addr %s239, 4
        %s241 = scalar_lea.vmem %s3, %s240
        %s242 = smul.u32 16, %s22
        %p243 = scmp.lt.s32.totalorder %s21, 1
        %s244 = scalar_select %p243, %s21, 1
        %s245 = smul.addr %s244, 2
        %s246 = smul.addr %s245, 4
        %s247 = scalar_lea.vmem %s1, %s246
        %p248 = scmp.lt.s32.totalorder %s21, 1
        %s249 = scalar_select %p248, %s21, 1
        %s250 = smul.addr %s249, 2
        %s251 = smul.addr %s250, 4
        %s252 = scalar_lea.vmem %s2, %s251
        %s253 = smul.u32 16, %s22
        %p254 = scmp.lt.s32.totalorder %s21, 1
        %s255 = scalar_select %p254, %s21, 1
        %p256 = scmp.lt.s32.totalorder %s253, 31
        %s257 = scalar_select %p256, %s253, 31
        %s258 = smul.addr %s257, 2
        %s259 = smul.addr %s255, 64
        %s260 = sadd.s32 %s258, %s259
        %s261 = smul.addr %s260, 4
        %s262 = scalar_lea.vmem %s3, %s261
        %s263 = smul.u32 16, %s22
        %v265 = vld [vmem:[%s247] sm:$0xf]
        %v266 = vld [vmem:[%s247 + $0x4] sm:$0xf]
        %v267 = vld [vmem:[%s252] sm:$0xf]
        %v268 = vld [vmem:[%s252 + $0x4] sm:$0xf]
        %v269 = vld [vmem:[%s203] sm:$0xff]
        %v270 = vld [vmem:[%s203 + $0x8] sm:$0xff]
        %v271 = vld [vmem:[%s203 + $0x10] sm:$0xff]
        %v272 = vld [vmem:[%s203 + $0x18] sm:$0xff]
        %v273 = vld [vmem:[%s203 + $0x20] sm:$0xff]
        %v274 = vld [vmem:[%s203 + $0x28] sm:$0xff]
        %v275 = vld [vmem:[%s203 + $0x30] sm:$0xff]
        %v276 = vld [vmem:[%s203 + $0x38] sm:$0xff]
        %v277 = vld [vmem:[%s203 + $0x40] sm:$0xff]
        %v278 = vld [vmem:[%s203 + $0x48] sm:$0xff]
        %v279 = vld [vmem:[%s203 + $0x50] sm:$0xff]
        %v280 = vld [vmem:[%s203 + $0x58] sm:$0xff]
        %v281 = vld [vmem:[%s203 + $0x60] sm:$0xff]
        %v282 = vld [vmem:[%s203 + $0x68] sm:$0xff]
        %v283 = vld [vmem:[%s203 + $0x70] sm:$0xff]
        %v284 = vld [vmem:[%s203 + $0x78] sm:$0xff]
        %v285 = vld [vmem:[%s203 + $0x80] sm:$0xff]
        %v286 = vld [vmem:[%s203 + $0x88] sm:$0xff]
        %v287 = vld [vmem:[%s203 + $0x90] sm:$0xff]
        %v288 = vld [vmem:[%s203 + $0x98] sm:$0xff]
        %v289 = vld [vmem:[%s203 + $0xa0] sm:$0xff]
        %v290 = vld [vmem:[%s203 + $0xa8] sm:$0xff]
        %v291 = vld [vmem:[%s203 + $0xb0] sm:$0xff]
        %v292 = vld [vmem:[%s203 + $0xb8] sm:$0xff]
        %v293 = vld [vmem:[%s203 + $0xc0] sm:$0xff]
        %v294 = vld [vmem:[%s203 + $0xc8] sm:$0xff]
        %v295 = vld [vmem:[%s203 + $0xd0] sm:$0xff]
        %v296 = vld [vmem:[%s203 + $0xd8] sm:$0xff]
        %v297 = vld [vmem:[%s203 + $0xe0] sm:$0xff]
        %v298 = vld [vmem:[%s203 + $0xe8] sm:$0xff]
        %v299 = vld [vmem:[%s203 + $0xf0] sm:$0xff]
        %v300 = vld [vmem:[%s203 + $0xf8] sm:$0xff]
        %v301 = vpack.c.bf16 %v269, %v269
        %v302 = vpack.c.bf16 %v270, %v270
        %v303 = vpack.c.bf16 %v271, %v271
        %v304 = vpack.c.bf16 %v272, %v272
        %v305 = vpack.c.bf16 %v273, %v273
        %v306 = vpack.c.bf16 %v274, %v274
        %v307 = vpack.c.bf16 %v275, %v275
        %v308 = vpack.c.bf16 %v276, %v276
        %v309 = vpack.c.bf16 %v277, %v277
        %v310 = vpack.c.bf16 %v278, %v278
        %v311 = vpack.c.bf16 %v279, %v279
        %v312 = vpack.c.bf16 %v280, %v280
        %v313 = vpack.c.bf16 %v281, %v281
        %v314 = vpack.c.bf16 %v282, %v282
        %v315 = vpack.c.bf16 %v283, %v283
        %v316 = vpack.c.bf16 %v284, %v284
        %v317 = vpack.c.bf16 %v285, %v285
        %v318 = vpack.c.bf16 %v286, %v286
        %v319 = vpack.c.bf16 %v287, %v287
        %v320 = vpack.c.bf16 %v288, %v288
        %v321 = vpack.c.bf16 %v289, %v289
        %v322 = vpack.c.bf16 %v290, %v290
        %v323 = vpack.c.bf16 %v291, %v291
        %v324 = vpack.c.bf16 %v292, %v292
        %v325 = vpack.c.bf16 %v293, %v293
        %v326 = vpack.c.bf16 %v294, %v294
        %v327 = vpack.c.bf16 %v295, %v295
        %v328 = vpack.c.bf16 %v296, %v296
        %v329 = vpack.c.bf16 %v297, %v297
        %v330 = vpack.c.bf16 %v298, %v298
        %v331 = vpack.c.bf16 %v299, %v299
        %v332 = vpack.c.bf16 %v300, %v300
        %v365 = vunpack.c.l.b16 %v301
        %v366 = vunpack.c.l.b16 %v302
        %v367 = vunpack.c.l.b16 %v303
        %v368 = vunpack.c.l.b16 %v304
        %v369 = vunpack.c.l.b16 %v305
        %v370 = vunpack.c.l.b16 %v306
        %v371 = vunpack.c.l.b16 %v307
        %v372 = vunpack.c.l.b16 %v308
        %v373 = vunpack.c.l.b16 %v309
        %v374 = vunpack.c.l.b16 %v310
        %v375 = vunpack.c.l.b16 %v311
        %v376 = vunpack.c.l.b16 %v312
        %v377 = vunpack.c.l.b16 %v313
        %v378 = vunpack.c.l.b16 %v314
        %v379 = vunpack.c.l.b16 %v315
        %v380 = vunpack.c.l.b16 %v316
        %v381 = vunpack.c.l.b16 %v317
        %v382 = vunpack.c.l.b16 %v318
        %v383 = vunpack.c.l.b16 %v319
        %v384 = vunpack.c.l.b16 %v320
        %v385 = vunpack.c.l.b16 %v321
        %v386 = vunpack.c.l.b16 %v322
        %v387 = vunpack.c.l.b16 %v323
        %v388 = vunpack.c.l.b16 %v324
        %v389 = vunpack.c.l.b16 %v325
        %v390 = vunpack.c.l.b16 %v326
        %v391 = vunpack.c.l.b16 %v327
        %v392 = vunpack.c.l.b16 %v328
        %v393 = vunpack.c.l.b16 %v329
        %v394 = vunpack.c.l.b16 %v330
        %v395 = vunpack.c.l.b16 %v331
        %v396 = vunpack.c.l.b16 %v332
        %v397 = vpack.c.b16 %v366, %v365
        %v398 = vpack.c.b16 %v368, %v367
        %v399 = vpack.c.b16 %v370, %v369
        %v400 = vpack.c.b16 %v372, %v371
        %v401 = vpack.c.b16 %v374, %v373
        %v402 = vpack.c.b16 %v376, %v375
        %v403 = vpack.c.b16 %v378, %v377
        %v404 = vpack.c.b16 %v380, %v379
        %v405 = vpack.c.b16 %v382, %v381
        %v406 = vpack.c.b16 %v384, %v383
        %v407 = vpack.c.b16 %v386, %v385
        %v408 = vpack.c.b16 %v388, %v387
        %v409 = vpack.c.b16 %v390, %v389
        %v410 = vpack.c.b16 %v392, %v391
        %v411 = vpack.c.b16 %v394, %v393
        %v412 = vpack.c.b16 %v396, %v395
        %v415 = vunpack.c.l.b16 %v267
        %v416 = vunpack.c.l.b16 %v268
        %v417 = vpack.c.b16 %v416, %v415
        %vm419 = vcmask 130048
        %v421 = vsel %vm419, %v397, 0
        %v424 = vsel %vm419, %v398, 0
        %v427 = vsel %vm419, %v399, 0
        %v430 = vsel %vm419, %v400, 0
        %v433 = vsel %vm419, %v401, 0
        %v436 = vsel %vm419, %v402, 0
        %v439 = vsel %vm419, %v403, 0
        %v442 = vsel %vm419, %v404, 0
        %v445 = vsel %vm419, %v405, 0
        %v448 = vsel %vm419, %v406, 0
        %v451 = vsel %vm419, %v407, 0
        %v454 = vsel %vm419, %v408, 0
        %v457 = vsel %vm419, %v409, 0
        %v460 = vsel %vm419, %v410, 0
        %v463 = vsel %vm419, %v411, 0
        %v466 = vsel %vm419, %v412, 0
        %468 = vmatpush.bf16.msra.mxu0 0
        %469 = vmatpush.bf16.msra.mxu0 0
        %470 = vmatpush.bf16.msra.mxu0 0
        %471 = vmatpush.bf16.msra.mxu0 0
        %472 = vmatpush.bf16.msra.mxu0 0
        %473 = vmatpush.bf16.msra.mxu0 0
        %474 = vmatpush.bf16.msra.mxu0 0
        %475 = vmatpush.bf16.msra.mxu0 %v417
        %476 = vmatmul.bf16.gmra.mxu0 %v421
        %v477 = vpop.f32.mrf.mxu0
        %v478 = vadd.f32 0.0, %v477
        %v479 = vpop.f32.mrf.mxu0
        %v480 = vadd.f32 0.0, %v479
        %481 = vmatmul.bf16.gmra.mxu0 %v424
        %v482 = vpop.f32.mrf.mxu0
        %v483 = vadd.f32 0.0, %v482
        %v484 = vpop.f32.mrf.mxu0
        %v485 = vadd.f32 0.0, %v484
        %486 = vmatmul.bf16.gmra.mxu0 %v427
        %v487 = vpop.f32.mrf.mxu0
        %v488 = vadd.f32 0.0, %v487
        %v489 = vpop.f32.mrf.mxu0
        %v490 = vadd.f32 0.0, %v489
        %491 = vmatmul.bf16.gmra.mxu0 %v430
        %v492 = vpop.f32.mrf.mxu0
        %v493 = vadd.f32 0.0, %v492
        %v494 = vpop.f32.mrf.mxu0
        %v495 = vadd.f32 0.0, %v494
        %496 = vmatmul.bf16.gmra.mxu0 %v433
        %v497 = vpop.f32.mrf.mxu0
        %v498 = vadd.f32 0.0, %v497
        %v499 = vpop.f32.mrf.mxu0
        %v500 = vadd.f32 0.0, %v499
        %501 = vmatmul.bf16.gmra.mxu0 %v436
        %v502 = vpop.f32.mrf.mxu0
        %v503 = vadd.f32 0.0, %v502
        %v504 = vpop.f32.mrf.mxu0
        %v505 = vadd.f32 0.0, %v504
        %506 = vmatmul.bf16.gmra.mxu0 %v439
        %v507 = vpop.f32.mrf.mxu0
        %v508 = vadd.f32 0.0, %v507
        %v509 = vpop.f32.mrf.mxu0
        %v510 = vadd.f32 0.0, %v509
        %511 = vmatmul.bf16.gmra.mxu0 %v442
        %v512 = vpop.f32.mrf.mxu0
        %v513 = vadd.f32 0.0, %v512
        %v514 = vpop.f32.mrf.mxu0
        %v515 = vadd.f32 0.0, %v514
        %516 = vmatmul.bf16.gmra.mxu0 %v445
        %v517 = vpop.f32.mrf.mxu0
        %v518 = vadd.f32 0.0, %v517
        %v519 = vpop.f32.mrf.mxu0
        %v520 = vadd.f32 0.0, %v519
        %521 = vmatmul.bf16.gmra.mxu0 %v448
        %v522 = vpop.f32.mrf.mxu0
        %v523 = vadd.f32 0.0, %v522
        %v524 = vpop.f32.mrf.mxu0
        %v525 = vadd.f32 0.0, %v524
        %526 = vmatmul.bf16.gmra.mxu0 %v451
        %v527 = vpop.f32.mrf.mxu0
        %v528 = vadd.f32 0.0, %v527
        %v529 = vpop.f32.mrf.mxu0
        %v530 = vadd.f32 0.0, %v529
        %531 = vmatmul.bf16.gmra.mxu0 %v454
        %v532 = vpop.f32.mrf.mxu0
        %v533 = vadd.f32 0.0, %v532
        %v534 = vpop.f32.mrf.mxu0
        %v535 = vadd.f32 0.0, %v534
        %536 = vmatmul.bf16.gmra.mxu0 %v457
        %v537 = vpop.f32.mrf.mxu0
        %v538 = vadd.f32 0.0, %v537
        %v539 = vpop.f32.mrf.mxu0
        %v540 = vadd.f32 0.0, %v539
        %541 = vmatmul.bf16.gmra.mxu0 %v460
        %v542 = vpop.f32.mrf.mxu0
        %v543 = vadd.f32 0.0, %v542
        %v544 = vpop.f32.mrf.mxu0
        %v545 = vadd.f32 0.0, %v544
        %546 = vmatmul.bf16.gmra.mxu0 %v463
        %v547 = vpop.f32.mrf.mxu0
        %v548 = vadd.f32 0.0, %v547
        %v549 = vpop.f32.mrf.mxu0
        %v550 = vadd.f32 0.0, %v549
        %551 = vmatmul.bf16.gmra.mxu0 %v466
        %v552 = vpop.f32.mrf.mxu0
        %v553 = vadd.f32 0.0, %v552
        %v554 = vpop.f32.mrf.mxu0
        %v555 = vadd.f32 0.0, %v554
        %556 = vdwg.mxu0
        %v557 = vpack.c.bf16 %v478, %v478
        %v558 = vpack.c.bf16 %v480, %v480
        %v559 = vpack.c.bf16 %v483, %v483
        %v560 = vpack.c.bf16 %v485, %v485
        %v561 = vpack.c.bf16 %v488, %v488
        %v562 = vpack.c.bf16 %v490, %v490
        %v563 = vpack.c.bf16 %v493, %v493
        %v564 = vpack.c.bf16 %v495, %v495
        %v565 = vpack.c.bf16 %v498, %v498
        %v566 = vpack.c.bf16 %v500, %v500
        %v567 = vpack.c.bf16 %v503, %v503
        %v568 = vpack.c.bf16 %v505, %v505
        %v569 = vpack.c.bf16 %v508, %v508
        %v570 = vpack.c.bf16 %v510, %v510
        %v571 = vpack.c.bf16 %v513, %v513
        %v572 = vpack.c.bf16 %v515, %v515
        %v573 = vpack.c.bf16 %v518, %v518
        %v574 = vpack.c.bf16 %v520, %v520
        %v575 = vpack.c.bf16 %v523, %v523
        %v576 = vpack.c.bf16 %v525, %v525
        %v577 = vpack.c.bf16 %v528, %v528
        %v578 = vpack.c.bf16 %v530, %v530
        %v579 = vpack.c.bf16 %v533, %v533
        %v580 = vpack.c.bf16 %v535, %v535
        %v581 = vpack.c.bf16 %v538, %v538
        %v582 = vpack.c.bf16 %v540, %v540
        %v583 = vpack.c.bf16 %v543, %v543
        %v584 = vpack.c.bf16 %v545, %v545
        %v585 = vpack.c.bf16 %v548, %v548
        %v586 = vpack.c.bf16 %v550, %v550
        %v587 = vpack.c.bf16 %v553, %v553
        %v588 = vpack.c.bf16 %v555, %v555
        %v591 = vunpack.c.l.b16 %v265
        %v592 = vunpack.c.l.b16 %v266
        %v593 = vpack.c.b16 %v592, %v591
        %v596 = vunpack.c.l.b16 %v557
        %v597 = vunpack.c.l.b16 %v558
        %v598 = vpack.c.b16 %v597, %v596
        %v601 = vsel %vm419, %v593, 0
        %603 = vmatpush.bf16.msra.mxu0 0
        %604 = vmatpush.bf16.msra.mxu0 0
        %605 = vmatpush.bf16.msra.mxu0 0
        %606 = vmatpush.bf16.msra.mxu0 0
        %607 = vmatpush.bf16.msra.mxu0 0
        %608 = vmatpush.bf16.msra.mxu0 0
        %609 = vmatpush.bf16.msra.mxu0 0
        %610 = vmatpush.bf16.msra.mxu0 %v598
        %611 = vmatmul.bf16.gmra.mxu0 %v601
        %v612 = vpop.f32.mrf.mxu0
        %v613 = vadd.f32 0.0, %v612
        %v614 = vpop.f32.mrf.mxu0
        %v615 = vadd.f32 0.0, %v614
        %616 = vdwg.mxu0
        %v617 = vpack.c.bf16 %v613, %v613
        %v618 = vpack.c.bf16 %v615, %v615
        %vm619 = vcmask 125952
        %620 = vst.msk [vmem:[%s262] sm:$0xf] %vm619, %v617
        %621 = vst.msk [vmem:[%s262 + $0x4] sm:$0xf] %vm619, %v618
        %v624 = vunpack.c.l.b16 %v559
        %v625 = vunpack.c.l.b16 %v560
        %v626 = vpack.c.b16 %v625, %v624
        %628 = vmatpush.bf16.msra.mxu0 0
        %629 = vmatpush.bf16.msra.mxu0 0
        %630 = vmatpush.bf16.msra.mxu0 0
        %631 = vmatpush.bf16.msra.mxu0 0
        %632 = vmatpush.bf16.msra.mxu0 0
        %633 = vmatpush.bf16.msra.mxu0 0
        %634 = vmatpush.bf16.msra.mxu0 0
        %635 = vmatpush.bf16.msra.mxu0 %v626
        %636 = vmatmul.bf16.gmra.mxu0 %v601
        %v637 = vpop.f32.mrf.mxu0
        %v638 = vadd.f32 0.0, %v637
        %v639 = vpop.f32.mrf.mxu0
        %v640 = vadd.f32 0.0, %v639
        %641 = vdwg.mxu0
        %v642 = vpack.c.bf16 %v638, %v638
        %v643 = vpack.c.bf16 %v640, %v640
        %s644 = scalar_lea.vmem %s262, 8
        %645 = vst.msk [vmem:[%s644] sm:$0xf] %vm619, %v642
        %646 = vst.msk [vmem:[%s644 + $0x4] sm:$0xf] %vm619, %v643
        %v649 = vunpack.c.l.b16 %v561
        %v650 = vunpack.c.l.b16 %v562
        %v651 = vpack.c.b16 %v650, %v649
        %653 = vmatpush.bf16.msra.mxu0 0
        %654 = vmatpush.bf16.msra.mxu0 0
        %655 = vmatpush.bf16.msra.mxu0 0
        %656 = vmatpush.bf16.msra.mxu0 0
        %657 = vmatpush.bf16.msra.mxu0 0
        %658 = vmatpush.bf16.msra.mxu0 0
        %659 = vmatpush.bf16.msra.mxu0 0
        %660 = vmatpush.bf16.msra.mxu0 %v651
        %661 = vmatmul.bf16.gmra.mxu0 %v601
        %v662 = vpop.f32.mrf.mxu0
        %v663 = vadd.f32 0.0, %v662
        %v664 = vpop.f32.mrf.mxu0
        %v665 = vadd.f32 0.0, %v664
        %666 = vdwg.mxu0
        %v667 = vpack.c.bf16 %v663, %v663
        %v668 = vpack.c.bf16 %v665, %v665
        %s669 = scalar_lea.vmem %s262, 16
        %670 = vst.msk [vmem:[%s669] sm:$0xf] %vm619, %v667
        %671 = vst.msk [vmem:[%s669 + $0x4] sm:$0xf] %vm619, %v668
        %v674 = vunpack.c.l.b16 %v563
        %v675 = vunpack.c.l.b16 %v564
        %v676 = vpack.c.b16 %v675, %v674
        %678 = vmatpush.bf16.msra.mxu0 0
        %679 = vmatpush.bf16.msra.mxu0 0
        %680 = vmatpush.bf16.msra.mxu0 0
        %681 = vmatpush.bf16.msra.mxu0 0
        %682 = vmatpush.bf16.msra.mxu0 0
        %683 = vmatpush.bf16.msra.mxu0 0
        %684 = vmatpush.bf16.msra.mxu0 0
        %685 = vmatpush.bf16.msra.mxu0 %v676
        %686 = vmatmul.bf16.gmra.mxu0 %v601
        %v687 = vpop.f32.mrf.mxu0
        %v688 = vadd.f32 0.0, %v687
        %v689 = vpop.f32.mrf.mxu0
        %v690 = vadd.f32 0.0, %v689
        %691 = vdwg.mxu0
        %v692 = vpack.c.bf16 %v688, %v688
        %v693 = vpack.c.bf16 %v690, %v690
        %s694 = scalar_lea.vmem %s262, 24
        %695 = vst.msk [vmem:[%s694] sm:$0xf] %vm619, %v692
        %696 = vst.msk [vmem:[%s694 + $0x4] sm:$0xf] %vm619, %v693
        %v699 = vunpack.c.l.b16 %v565
        %v700 = vunpack.c.l.b16 %v566
        %v701 = vpack.c.b16 %v700, %v699
        %703 = vmatpush.bf16.msra.mxu0 0
        %704 = vmatpush.bf16.msra.mxu0 0
        %705 = vmatpush.bf16.msra.mxu0 0
        %706 = vmatpush.bf16.msra.mxu0 0
        %707 = vmatpush.bf16.msra.mxu0 0
        %708 = vmatpush.bf16.msra.mxu0 0
        %709 = vmatpush.bf16.msra.mxu0 0
        %710 = vmatpush.bf16.msra.mxu0 %v701
        %711 = vmatmul.bf16.gmra.mxu0 %v601
        %v712 = vpop.f32.mrf.mxu0
        %v713 = vadd.f32 0.0, %v712
        %v714 = vpop.f32.mrf.mxu0
        %v715 = vadd.f32 0.0, %v714
        %716 = vdwg.mxu0
        %v717 = vpack.c.bf16 %v713, %v713
        %v718 = vpack.c.bf16 %v715, %v715
        %s719 = scalar_lea.vmem %s262, 32
        %720 = vst.msk [vmem:[%s719] sm:$0xf] %vm619, %v717
        %721 = vst.msk [vmem:[%s719 + $0x4] sm:$0xf] %vm619, %v718
        %v724 = vunpack.c.l.b16 %v567
        %v725 = vunpack.c.l.b16 %v568
        %v726 = vpack.c.b16 %v725, %v724
        %728 = vmatpush.bf16.msra.mxu0 0
        %729 = vmatpush.bf16.msra.mxu0 0
        %730 = vmatpush.bf16.msra.mxu0 0
        %731 = vmatpush.bf16.msra.mxu0 0
        %732 = vmatpush.bf16.msra.mxu0 0
        %733 = vmatpush.bf16.msra.mxu0 0
        %734 = vmatpush.bf16.msra.mxu0 0
        %735 = vmatpush.bf16.msra.mxu0 %v726
        %736 = vmatmul.bf16.gmra.mxu0 %v601
        %v737 = vpop.f32.mrf.mxu0
        %v738 = vadd.f32 0.0, %v737
        %v739 = vpop.f32.mrf.mxu0
        %v740 = vadd.f32 0.0, %v739
        %741 = vdwg.mxu0
        %v742 = vpack.c.bf16 %v738, %v738
        %v743 = vpack.c.bf16 %v740, %v740
        %s744 = scalar_lea.vmem %s262, 40
        %745 = vst.msk [vmem:[%s744] sm:$0xf] %vm619, %v742
        %746 = vst.msk [vmem:[%s744 + $0x4] sm:$0xf] %vm619, %v743
        %v749 = vunpack.c.l.b16 %v569
        %v750 = vunpack.c.l.b16 %v570
        %v751 = vpack.c.b16 %v750, %v749
        %753 = vmatpush.bf16.msra.mxu0 0
        %754 = vmatpush.bf16.msra.mxu0 0
        %755 = vmatpush.bf16.msra.mxu0 0
        %756 = vmatpush.bf16.msra.mxu0 0
        %757 = vmatpush.bf16.msra.mxu0 0
        %758 = vmatpush.bf16.msra.mxu0 0
        %759 = vmatpush.bf16.msra.mxu0 0
        %760 = vmatpush.bf16.msra.mxu0 %v751
        %761 = vmatmul.bf16.gmra.mxu0 %v601
        %v762 = vpop.f32.mrf.mxu0
        %v763 = vadd.f32 0.0, %v762
        %v764 = vpop.f32.mrf.mxu0
        %v765 = vadd.f32 0.0, %v764
        %766 = vdwg.mxu0
        %v767 = vpack.c.bf16 %v763, %v763
        %v768 = vpack.c.bf16 %v765, %v765
        %s769 = scalar_lea.vmem %s262, 48
        %770 = vst.msk [vmem:[%s769] sm:$0xf] %vm619, %v767
        %771 = vst.msk [vmem:[%s769 + $0x4] sm:$0xf] %vm619, %v768
        %v774 = vunpack.c.l.b16 %v571
        %v775 = vunpack.c.l.b16 %v572
        %v776 = vpack.c.b16 %v775, %v774
        %778 = vmatpush.bf16.msra.mxu0 0
        %779 = vmatpush.bf16.msra.mxu0 0
        %780 = vmatpush.bf16.msra.mxu0 0
        %781 = vmatpush.bf16.msra.mxu0 0
        %782 = vmatpush.bf16.msra.mxu0 0
        %783 = vmatpush.bf16.msra.mxu0 0
        %784 = vmatpush.bf16.msra.mxu0 0
        %785 = vmatpush.bf16.msra.mxu0 %v776
        %786 = vmatmul.bf16.gmra.mxu0 %v601
        %v787 = vpop.f32.mrf.mxu0
        %v788 = vadd.f32 0.0, %v787
        %v789 = vpop.f32.mrf.mxu0
        %v790 = vadd.f32 0.0, %v789
        %791 = vdwg.mxu0
        %v792 = vpack.c.bf16 %v788, %v788
        %v793 = vpack.c.bf16 %v790, %v790
        %s794 = scalar_lea.vmem %s262, 56
        %795 = vst.msk [vmem:[%s794] sm:$0xf] %vm619, %v792
        %796 = vst.msk [vmem:[%s794 + $0x4] sm:$0xf] %vm619, %v793
        %v799 = vunpack.c.l.b16 %v573
        %v800 = vunpack.c.l.b16 %v574
        %v801 = vpack.c.b16 %v800, %v799
        %803 = vmatpush.bf16.msra.mxu0 0
        %804 = vmatpush.bf16.msra.mxu0 0
        %805 = vmatpush.bf16.msra.mxu0 0
        %806 = vmatpush.bf16.msra.mxu0 0
        %807 = vmatpush.bf16.msra.mxu0 0
        %808 = vmatpush.bf16.msra.mxu0 0
        %809 = vmatpush.bf16.msra.mxu0 0
        %810 = vmatpush.bf16.msra.mxu0 %v801
        %811 = vmatmul.bf16.gmra.mxu0 %v601
        %v812 = vpop.f32.mrf.mxu0
        %v813 = vadd.f32 0.0, %v812
        %v814 = vpop.f32.mrf.mxu0
        %v815 = vadd.f32 0.0, %v814
        %816 = vdwg.mxu0
        %v817 = vpack.c.bf16 %v813, %v813
        %v818 = vpack.c.bf16 %v815, %v815
        %s819 = scalar_lea.vmem %s262, 64
        %820 = vst.msk [vmem:[%s819] sm:$0xf] %vm619, %v817
        %821 = vst.msk [vmem:[%s819 + $0x4] sm:$0xf] %vm619, %v818
        %v824 = vunpack.c.l.b16 %v575
        %v825 = vunpack.c.l.b16 %v576
        %v826 = vpack.c.b16 %v825, %v824
        %828 = vmatpush.bf16.msra.mxu0 0
        %829 = vmatpush.bf16.msra.mxu0 0
        %830 = vmatpush.bf16.msra.mxu0 0
        %831 = vmatpush.bf16.msra.mxu0 0
        %832 = vmatpush.bf16.msra.mxu0 0
        %833 = vmatpush.bf16.msra.mxu0 0
        %834 = vmatpush.bf16.msra.mxu0 0
        %835 = vmatpush.bf16.msra.mxu0 %v826
        %836 = vmatmul.bf16.gmra.mxu0 %v601
        %v837 = vpop.f32.mrf.mxu0
        %v838 = vadd.f32 0.0, %v837
        %v839 = vpop.f32.mrf.mxu0
        %v840 = vadd.f32 0.0, %v839
        %841 = vdwg.mxu0
        %v842 = vpack.c.bf16 %v838, %v838
        %v843 = vpack.c.bf16 %v840, %v840
        %s844 = scalar_lea.vmem %s262, 72
        %845 = vst.msk [vmem:[%s844] sm:$0xf] %vm619, %v842
        %846 = vst.msk [vmem:[%s844 + $0x4] sm:$0xf] %vm619, %v843
        %v849 = vunpack.c.l.b16 %v577
        %v850 = vunpack.c.l.b16 %v578
        %v851 = vpack.c.b16 %v850, %v849
        %853 = vmatpush.bf16.msra.mxu0 0
        %854 = vmatpush.bf16.msra.mxu0 0
        %855 = vmatpush.bf16.msra.mxu0 0
        %856 = vmatpush.bf16.msra.mxu0 0
        %857 = vmatpush.bf16.msra.mxu0 0
        %858 = vmatpush.bf16.msra.mxu0 0
        %859 = vmatpush.bf16.msra.mxu0 0
        %860 = vmatpush.bf16.msra.mxu0 %v851
        %861 = vmatmul.bf16.gmra.mxu0 %v601
        %v862 = vpop.f32.mrf.mxu0
        %v863 = vadd.f32 0.0, %v862
        %v864 = vpop.f32.mrf.mxu0
        %v865 = vadd.f32 0.0, %v864
        %866 = vdwg.mxu0
        %v867 = vpack.c.bf16 %v863, %v863
        %v868 = vpack.c.bf16 %v865, %v865
        %s869 = scalar_lea.vmem %s262, 80
        %870 = vst.msk [vmem:[%s869] sm:$0xf] %vm619, %v867
        %871 = vst.msk [vmem:[%s869 + $0x4] sm:$0xf] %vm619, %v868
        %v874 = vunpack.c.l.b16 %v579
        %v875 = vunpack.c.l.b16 %v580
        %v876 = vpack.c.b16 %v875, %v874
        %878 = vmatpush.bf16.msra.mxu0 0
        %879 = vmatpush.bf16.msra.mxu0 0
        %880 = vmatpush.bf16.msra.mxu0 0
        %881 = vmatpush.bf16.msra.mxu0 0
        %882 = vmatpush.bf16.msra.mxu0 0
        %883 = vmatpush.bf16.msra.mxu0 0
        %884 = vmatpush.bf16.msra.mxu0 0
        %885 = vmatpush.bf16.msra.mxu0 %v876
        %886 = vmatmul.bf16.gmra.mxu0 %v601
        %v887 = vpop.f32.mrf.mxu0
        %v888 = vadd.f32 0.0, %v887
        %v889 = vpop.f32.mrf.mxu0
        %v890 = vadd.f32 0.0, %v889
        %891 = vdwg.mxu0
        %v892 = vpack.c.bf16 %v888, %v888
        %v893 = vpack.c.bf16 %v890, %v890
        %s894 = scalar_lea.vmem %s262, 88
        %895 = vst.msk [vmem:[%s894] sm:$0xf] %vm619, %v892
        %896 = vst.msk [vmem:[%s894 + $0x4] sm:$0xf] %vm619, %v893
        %v899 = vunpack.c.l.b16 %v581
        %v900 = vunpack.c.l.b16 %v582
        %v901 = vpack.c.b16 %v900, %v899
        %903 = vmatpush.bf16.msra.mxu0 0
        %904 = vmatpush.bf16.msra.mxu0 0
        %905 = vmatpush.bf16.msra.mxu0 0
        %906 = vmatpush.bf16.msra.mxu0 0
        %907 = vmatpush.bf16.msra.mxu0 0
        %908 = vmatpush.bf16.msra.mxu0 0
        %909 = vmatpush.bf16.msra.mxu0 0
        %910 = vmatpush.bf16.msra.mxu0 %v901
        %911 = vmatmul.bf16.gmra.mxu0 %v601
        %v912 = vpop.f32.mrf.mxu0
        %v913 = vadd.f32 0.0, %v912
        %v914 = vpop.f32.mrf.mxu0
        %v915 = vadd.f32 0.0, %v914
        %916 = vdwg.mxu0
        %v917 = vpack.c.bf16 %v913, %v913
        %v918 = vpack.c.bf16 %v915, %v915
        %s919 = scalar_lea.vmem %s262, 96
        %920 = vst.msk [vmem:[%s919] sm:$0xf] %vm619, %v917
        %921 = vst.msk [vmem:[%s919 + $0x4] sm:$0xf] %vm619, %v918
        %v924 = vunpack.c.l.b16 %v583
        %v925 = vunpack.c.l.b16 %v584
        %v926 = vpack.c.b16 %v925, %v924
        %928 = vmatpush.bf16.msra.mxu0 0
        %929 = vmatpush.bf16.msra.mxu0 0
        %930 = vmatpush.bf16.msra.mxu0 0
        %931 = vmatpush.bf16.msra.mxu0 0
        %932 = vmatpush.bf16.msra.mxu0 0
        %933 = vmatpush.bf16.msra.mxu0 0
        %934 = vmatpush.bf16.msra.mxu0 0
        %935 = vmatpush.bf16.msra.mxu0 %v926
        %936 = vmatmul.bf16.gmra.mxu0 %v601
        %v937 = vpop.f32.mrf.mxu0
        %v938 = vadd.f32 0.0, %v937
        %v939 = vpop.f32.mrf.mxu0
        %v940 = vadd.f32 0.0, %v939
        %941 = vdwg.mxu0
        %v942 = vpack.c.bf16 %v938, %v938
        %v943 = vpack.c.bf16 %v940, %v940
        %s944 = scalar_lea.vmem %s262, 104
        %945 = vst.msk [vmem:[%s944] sm:$0xf] %vm619, %v942
        %946 = vst.msk [vmem:[%s944 + $0x4] sm:$0xf] %vm619, %v943
        %v949 = vunpack.c.l.b16 %v585
        %v950 = vunpack.c.l.b16 %v586
        %v951 = vpack.c.b16 %v950, %v949
        %953 = vmatpush.bf16.msra.mxu0 0
        %954 = vmatpush.bf16.msra.mxu0 0
        %955 = vmatpush.bf16.msra.mxu0 0
        %956 = vmatpush.bf16.msra.mxu0 0
        %957 = vmatpush.bf16.msra.mxu0 0
        %958 = vmatpush.bf16.msra.mxu0 0
        %959 = vmatpush.bf16.msra.mxu0 0
        %960 = vmatpush.bf16.msra.mxu0 %v951
        %961 = vmatmul.bf16.gmra.mxu0 %v601
        %v962 = vpop.f32.mrf.mxu0
        %v963 = vadd.f32 0.0, %v962
        %v964 = vpop.f32.mrf.mxu0
        %v965 = vadd.f32 0.0, %v964
        %966 = vdwg.mxu0
        %v967 = vpack.c.bf16 %v963, %v963
        %v968 = vpack.c.bf16 %v965, %v965
        %s969 = scalar_lea.vmem %s262, 112
        %970 = vst.msk [vmem:[%s969] sm:$0xf] %vm619, %v967
        %971 = vst.msk [vmem:[%s969 + $0x4] sm:$0xf] %vm619, %v968
        %v974 = vunpack.c.l.b16 %v587
        %v975 = vunpack.c.l.b16 %v588
        %v976 = vpack.c.b16 %v975, %v974
        %978 = vmatpush.bf16.msra.mxu0 0
        %979 = vmatpush.bf16.msra.mxu0 0
        %980 = vmatpush.bf16.msra.mxu0 0
        %981 = vmatpush.bf16.msra.mxu0 0
        %982 = vmatpush.bf16.msra.mxu0 0
        %983 = vmatpush.bf16.msra.mxu0 0
        %984 = vmatpush.bf16.msra.mxu0 0
        %985 = vmatpush.bf16.msra.mxu0 %v976
        %986 = vmatmul.bf16.gmra.mxu0 %v601
        %v987 = vpop.f32.mrf.mxu0
        %v988 = vadd.f32 0.0, %v987
        %v989 = vpop.f32.mrf.mxu0
        %v990 = vadd.f32 0.0, %v989
        %991 = vdwg.mxu0
        %v992 = vpack.c.bf16 %v988, %v988
        %v993 = vpack.c.bf16 %v990, %v990
        %s994 = scalar_lea.vmem %s262, 120
        %995 = vst.msk [vmem:[%s994] sm:$0xf] %vm619, %v992
        %996 = vst.msk [vmem:[%s994 + $0x4] sm:$0xf] %vm619, %v993
        %s997 = smul.u32 16, %s22
        %p998 = scmp.lt.s32.totalorder %s21, 1
        %s999 = scalar_select %p998, %s21, 1
        %p1000 = scmp.lt.s32.totalorder %s997, 31
        %s1001 = scalar_select %p1000, %s997, 31
        %s1002 = smul.addr %s1001, 2
        %s1003 = smul.addr %s999, 64
        %s1004 = sadd.s32 %s1002, %s1003
        %s1005 = smul.addr %s1004, 4
        %s1006 = scalar_lea.vmem %s3, %s1005
        // Predicated region
        $region37: #{training_augments.2} parent=31 // pred_check
          %p1007 = pneg %p129
        $region38: #{training_augments.2} parent=31 // pred_check_branch
          %1009 = sbr.rel (%p1007) target = $region40
        $region39: #{training_augments.2} parent=31 // pred_region
          %s1010 = smul.u32 16, %s22
        $region40: #{training_augments.2} parent=31 // pred_fallthru
          _
      $region32: #{training_augments.2} parent=5 // pred_fallthru
        _
      %p1011 = scmp.le.s32.totalorder 2, %s12
      // Predicated region
      $region41: #{training_augments.2} parent=5 // pred_check
        %p1012 = pneg %p1011
      $region42: #{training_augments.2} parent=5 // pred_check_branch
        %1014 = sbr.rel (%p1012) target = $region44
      $region43: #{training_augments.2} parent=5 // pred_region
        %s1015 = ssub.s32 %s12, 2
        // Predicated region
        $region45: #{training_augments.2} parent=43 // pred_check
          %p1016 = pneg %p135
        $region46: #{training_augments.2} parent=43 // pred_check_branch
          %1018 = sbr.rel (%p1016) target = $region48
        $region47: #{training_augments.2} parent=43 // pred_region
          %s1019 = smul.u32 16, %s24
          %p1020 = scmp.lt.s32.totalorder %s23, 1
          %s1021 = scalar_select %p1020, %s23, 1
          %p1022 = scmp.lt.s32.totalorder %s1019, 31
          %s1023 = scalar_select %p1022, %s1019, 31
          %s1024 = smul.addr %s1023, 2
          %s1025 = smul.addr %s1021, 64
          %s1026 = sadd.s32 %s1024, %s1025
          %s1027 = smul.addr %s1026, 4
          %s1028 = scalar_lea.vmem %s3, %s1027
        $region48: #{training_augments.2} parent=43 // pred_fallthru
          _
      $region44: #{training_augments.2} parent=5 // pred_fallthru
        _
    $region6: #{training_augments.2} parent=1 // loop_footer
      %s16 = sadd.s32 1, %s12
    $region7: #{training_augments.2} parent=1 // loop_footer_branch
      %11 = sbr.rel target = $region3
    $region8: #{training_augments.2} parent=1 // loop_exit
      _
    %1029 = vsyncpa [#allocation3], 1
    %s1030 = scalar_lea.sflag [#allocation3], 1
    %1031 = vsyncpa %s1030, 1

</llo_original>
